<compile_context>
chip_gen: v7x
topology: tpu7x:2x2x1
jax: 0.10.0
libtpu: 0.0.40
codegen_flags: <defaults>
</compile_context>

<pallas_src>
import jax
import jax.numpy as jnp
from jax.experimental import pallas as pl
from jax.experimental.pallas import tpu as pltpu


def _round_up(x, m):
    return ((x + m - 1) // m) * m


def critic_kernel(q_ref, hs_ref, lens_ref,
                  wwv_ref, wwq_ref, bw_ref, vw_ref,
                  wsv_ref, wsq_ref, bs_ref, vs_ref,
                  weh_ref, weq_ref, be_ref, wd_ref,
                  sc_ref,
                  packed_ref):
    TB, S, T, V = hs_ref.shape
    H = wwv_ref.shape[1]

    q = q_ref[...]                  # (TB, Q)     compute dtype (f32 or bf16)
    hs = hs_ref[...]                # (TB,S,T,V)  compute dtype
    lens = lens_ref[...]            # (TB, S)     int32

    # packed scalar biases from a single 1-D SMEM ref
    bvw = sc_ref[0]
    bvs = sc_ref[1]
    bd = sc_ref[2]

    # ---------------- word-level attention ----------------
    # Dominant FLOPs: one 2-D MXU matmul over the value dim (leading dims merged,
    # minor/lane dim V untouched -> layout-safe reshape).
    hs2 = hs.reshape(TB * S * T, V)
    proj_w = jnp.dot(hs2, wwv_ref[...],
                     preferred_element_type=jnp.float32).reshape(TB, S, T, H)
    # bias hoisted to the (TB,H) query projection -> one small add instead of a
    # full (TB,S,T,H) add.
    qb_w = jnp.dot(q, wwq_ref[...], preferred_element_type=jnp.float32) + bw_ref[...]
    hw = jnp.tanh(proj_w + qb_w[:, None, None, :])                            # f32
    # v_w . tanh(...): H sits on the lane axis -> one XLU lane-reduce per vreg.
    scores_w = jnp.sum(hw * vw_ref[...], axis=-1) + bvw                       # (TB,S,T)

    t_idx = jax.lax.broadcasted_iota(jnp.int32, (TB, S, T), 2)
    word_mask = (t_idx < lens[:, :, None]).astype(jnp.float32)
    s_m = jnp.where(word_mask > 0, scores_w, jnp.float32(-1e30))
    m_w = jnp.max(s_m, axis=-1, keepdims=True)
    e_w = jnp.exp(s_m - m_w) * word_mask
    # exact division: returned probabilities must sum to 1 for downstream use
    word_p = e_w / jnp.maximum(jnp.sum(e_w, axis=-1, keepdims=True),
                               jnp.float32(1e-30))                            # (TB,S,T)

    # weighted word sum: f32 word_p * (possibly bf16) hs upcasts per-vreg, no
    # explicit full-size f32 copy of the hs tile.
    sent_vec = jnp.sum(word_p[:, :, :, None] * hs, axis=2)                    # (TB,S,V) f32

    # ---------------- sentence-level attention ----------------
    # sent_vec stays f32 (no re-quantization); wsv is tiny, upcast on the fly.
    proj_s = jnp.dot(sent_vec.reshape(TB * S, V),
                     wsv_ref[...].astype(jnp.float32),
                     preferred_element_type=jnp.float32).reshape(TB, S, H)
    qb_s = jnp.dot(q, wsq_ref[...], preferred_element_type=jnp.float32) + bs_ref[...]
    hsent = jnp.tanh(proj_s + qb_s[:, None, :])                               # (TB,S,H)
    scores_s = jnp.sum(hsent * vs_ref[...], axis=-1) + bvs                    # (TB,S)
    m_s = jnp.max(scores_s, axis=-1, keepdims=True)
    e_s = jnp.exp(scores_s - m_s)
    sent_p = e_s / jnp.sum(e_s, axis=-1, keepdims=True)                       # (TB,S)
    h = jnp.sum(sent_p[:, :, None] * sent_vec, axis=1)                        # (TB,V) f32

    # ---------------- selection head ----------------
    he = jnp.tanh(jnp.dot(h, weh_ref[...].astype(jnp.float32),
                          preferred_element_type=jnp.float32)
                  + jnp.dot(q, weq_ref[...], preferred_element_type=jnp.float32)
                  + be_ref[...])                                              # (TB,Sel)
    out = jnp.dot(he, wd_ref[...], preferred_element_type=jnp.float32) + bd   # (TB,1)

    # ---------------- single dense lane-packed store ----------------
    # slab layout per row: [ outs(1) | sent_p(S) | word_p(S*T) | zero pad ]
    PAD = packed_ref.shape[1]
    PACK = 1 + S + S * T
    parts = [out, sent_p]
    for s in range(S):   # static slices; avoids a minor-dim-merging in-kernel reshape
        parts.append(word_p[:, s, :])
    if PAD > PACK:
        parts.append(jnp.zeros((TB, PAD - PACK), jnp.float32))
    packed_ref[...] = jnp.concatenate(parts, axis=-1)


def critic_forward(q, hs, lens, p, *, compute_dtype=jnp.float32, batch_tile=None):
    """Run the critic forward pass. Returns (outs (B,1), sent_p (B,S), word_ps (B,S,T))."""
    B, S, T, V = hs.shape
    Q = q.shape[1]
    H = p['wwv'].shape[1]
    SEL = p['weh'].shape[1]
    cdt = compute_dtype
    itemsize = jnp.dtype(cdt).itemsize

    PACK = 1 + S + S * T
    PAD = _round_up(PACK, 128)          # lane-dense (multiple of 128) output slab

    # big MXU operands in compute dtype; small score/bias vectors stay f32
    wwv = p['wwv'].astype(cdt); wwq = p['wwq'].astype(cdt)
    wsv = p['wsv'].astype(cdt); wsq = p['wsq'].astype(cdt)
    weh = p['weh'].astype(cdt); weq = p['weq'].astype(cdt)
    bw = p['bw'].astype(jnp.float32); vw = p['vw'].astype(jnp.float32)
    bs_ = p['bs'].astype(jnp.float32); vs = p['vs'].astype(jnp.float32)
    be = p['be'].astype(jnp.float32); wd = p['wd'].astype(jnp.float32)
    scalars = jnp.array([p['bvw'][0, 0], p['bvs'][0, 0], p['bd'][0, 0]],
                        dtype=jnp.float32)                       # 1-D SMEM (3,)

    weight_list = (wwv, wwq, bw, vw, wsv, wsq, bs_, vs, weh, weq, be, wd)
    weight_bytes = 2 * sum(int(w.size) * w.dtype.itemsize for w in weight_list)

    # ---- generation-aware VMEM budget -> batch tile ----
    try:
        vmem_cap = int(pltpu.get_tpu_info().vmem_capacity_bytes)
    except Exception:                                            # pragma: no cover
        vmem_cap = 64 * 1024 * 1024                              # v7x-safe fallback
    vmem_budget = int(vmem_cap * 0.70)                           # ~45 MiB v7x / ~90 MiB v5e,v6e
    vmem_limit = min(int(vmem_cap * 0.75), 100 * 1024 * 1024)

    # per-batch-row working set: double-buffered inputs + output, plus the f32
    # intermediates (proj_w, hw, word_p, sent_vec, ...) produced per grid step.
    in_row = (S * T * V + Q) * itemsize + S * 4
    out_row = PAD * 4
    inter_row = 4 * (2 * S * T * H + 2 * S * T + 2 * S * V + S * H + PAD)
    per_row = 2 * (in_row + out_row) + inter_row

    if batch_tile is None:
        tb = (vmem_budget - weight_bytes) // max(per_row, 1)
        tb = max(8, min(int(tb), 256))        # cap per-step latency / keep grid length up
        tb = (tb // 8) * 8
    else:
        tb = batch_tile
    assert tb % 8 == 0, "batch tile must be sublane (8) aligned"

    B8 = _round_up(B, 8)
    TB = min(tb, B8)
    # keep >= 2 grid steps so both v7x TensorCores get batch tiles when possible
    if B8 // TB < 2 and B8 >= 16:
        TB = max(8, ((B8 // 2) // 8) * 8)
    B_pad = _round_up(B, TB)
    pad = B_pad - B

    # batch padding (pad lens with 1 so padded rows stay finite; they are sliced off)
    qp = jnp.pad(q, ((0, pad), (0, 0))).astype(cdt)
    hsp = jnp.pad(hs, ((0, pad), (0, 0), (0, 0), (0, 0))).astype(cdt)
    lensp = jnp.pad(lens, ((0, pad), (0, 0)), constant_values=1)

    grid = (B_pad // TB,)

    def resident(arr):      # weights: constant block index -> DMA'd once, stays in VMEM
        return pl.BlockSpec(arr.shape, lambda i: (0, 0))

    in_specs = [
        pl.BlockSpec((TB, Q), lambda i: (i, 0)),              # q
        pl.BlockSpec((TB, S, T, V), lambda i: (i, 0, 0, 0)),  # hs (dominant stream)
        pl.BlockSpec((TB, S), lambda i: (i, 0)),              # lens (feeds a vector mask)
        resident(wwv), resident(wwq), resident(bw), resident(vw),
        resident(wsv), resident(wsq), resident(bs_), resident(vs),
        resident(weh), resident(weq), resident(be), resident(wd),
        pl.BlockSpec((3,), lambda i: (0,),
                     memory_space=pltpu.MemorySpace.SMEM),     # packed scalars
    ]
    out_spec = pl.BlockSpec((TB, PAD), lambda i: (i, 0))

    inputs = (qp, hsp, lensp,
              wwv, wwq, bw, vw,
              wsv, wsq, bs_, vs,
              weh, weq, be, wd,
              scalars)

    # advisory cost estimate for the XLA scheduler
    flops = (2 * B_pad * S * T * V * H        # word projection (dominant)
             + 2 * B_pad * Q * H * 2          # query projections
             + 2 * B_pad * S * T * H          # word scores
             + 2 * B_pad * S * T * V          # word-weighted sum
             + 2 * B_pad * S * V * H          # sentence projection
             + 2 * B_pad * S * H              # sentence scores
             + 2 * B_pad * S * V              # sentence-weighted sum
             + 2 * B_pad * (V + Q) * SEL      # head encoder
             + 2 * B_pad * SEL)               # head decoder
    transcendentals = B_pad * S * T * (H + 1) + B_pad * S * (H + 1) + B_pad * SEL
    bytes_accessed = int(sum(int(x.size) * x.dtype.itemsize for x in inputs)
                         + B_pad * PAD * 4)

    packed = pl.pallas_call(
        critic_kernel,
        out_shape=jax.ShapeDtypeStruct((B_pad, PAD), jnp.float32),
        grid_spec=pltpu.PrefetchScalarGridSpec(
            num_scalar_prefetch=0,
            grid=grid,
            in_specs=in_specs,
            out_specs=out_spec,
        ),
        compiler_params=pltpu.CompilerParams(
            dimension_semantics=("parallel",),   # batch tiles -> both v7x TCs
            vmem_limit_bytes=vmem_limit,         # generation-aware scoped limit
        ),
        cost_estimate=pl.CostEstimate(flops=int(flops),
                                      transcendentals=int(transcendentals),
                                      bytes_accessed=bytes_accessed),
    )(*inputs)

    outs = packed[:B, 0:1]
    sent_p = packed[:B, 1:1 + S]
    word_p = packed[:B, 1 + S:1 + S + S * T].reshape(B, S, T)
    return outs, sent_p, word_p


def critic_reference(q, hs, lens, p):
    """Plain-JAX reference with identical math (for correctness check)."""
    B, S, T, V = hs.shape
    proj_w = jnp.einsum('bstv,vh->bsth', hs, p['wwv'])
    hw = jnp.tanh(proj_w + (q @ p['wwq'])[:, None, None, :] + p['bw'])
    scores_w = jnp.sum(hw * p['vw'], -1) + p['bvw']
    mask = jnp.arange(T)[None, None, :] < lens[:, :, None]
    word_p = jax.nn.softmax(jnp.where(mask, scores_w, -1e30), axis=-1)
    word_p = word_p * mask / jnp.sum(word_p * mask, -1, keepdims=True)
    sent_vec = jnp.einsum('bst,bstv->bsv', word_p, hs)
    hsent = jnp.tanh(jnp.einsum('bsv,vh->bsh', sent_vec, p['wsv'])
                     + (q @ p['wsq'])[:, None, :] + p['bs'])
    scores_s = jnp.sum(hsent * p['vs'], -1) + p['bvs']
    sent_p = jax.nn.softmax(scores_s, axis=-1)
    h = jnp.einsum('bs,bsv->bv', sent_p, sent_vec)
    he = jnp.tanh(h @ p['weh'] + q @ p['weq'] + p['be'])
    out = he @ p['wd'] + p['bd']
    return out, sent_p, word_p


def init_params(key, Q, V, H, Sel, init_range=0.1):
    ks = jax.random.split(key, 15)
    u = lambda k, shape: jax.random.uniform(k, shape, jnp.float32,
                                            -init_range, init_range)
    return dict(
        wwv=u(ks[0], (V, H)), wwq=u(ks[1], (Q, H)), bw=u(ks[2], (1, H)),
        vw=u(ks[3], (1, H)), bvw=u(ks[4], (1, 1)),
        wsv=u(ks[5], (V, H)), wsq=u(ks[6], (Q, H)), bs=u(ks[7], (1, H)),
        vs=u(ks[8], (1, H)), bvs=u(ks[9], (1, 1)),
        weh=u(ks[10], (V, Sel)), weq=u(ks[11], (Q, Sel)), be=u(ks[12], (1, Sel)),
        wd=u(ks[13], (Sel, 1)), bd=u(ks[14], (1, 1)),
    )


if __name__ == "__main__":
    B, S, T = 2, 3, 8          # batch, sentences, words per sentence
    H = 16                     # hidden_size
    V = 2 * H                  # value_size = 2 * hidden_size
    Q = 16                     # query_size
    Sel = 32                   # selection_size

    key = jax.random.PRNGKey(0)
    kq, kh, kl, kp = jax.random.split(key, 4)
    q = jax.random.normal(kq, (B, Q), jnp.float32)
    hs = jax.random.normal(kh, (B, S, T, V), jnp.float32)
    lens = jax.random.randint(kl, (B, S), 1, T + 1, dtype=jnp.int32)
    params = init_params(kp, Q, V, H, Sel)

    r_outs, r_sent_p, r_word_ps = critic_reference(q, hs, lens, params)

    # f32 path (exact softmax division -> tight tolerance)
    outs, sent_p, word_ps = critic_forward(q, hs, lens, params)
    jax.block_until_ready((outs, sent_p, word_ps))
    assert jnp.allclose(outs, r_outs, atol=1e-3, rtol=1e-3)
    assert jnp.allclose(sent_p, r_sent_p, atol=1e-3, rtol=1e-3)
    assert jnp.allclose(word_ps, r_word_ps, atol=1e-3, rtol=1e-3)

    # bf16 input path (memory-bound optimization on ALL generations; f32 MXU
    # accumulation + f32 elementwise) -- loose check against the f32 reference.
    outs16, sent_p16, word_ps16 = critic_forward(q, hs, lens, params,
                                                 compute_dtype=jnp.bfloat16)
    jax.block_until_ready((outs16, sent_p16, word_ps16))
    assert bool(jnp.all(jnp.isfinite(outs16)))
    assert jnp.allclose(outs16, r_outs, atol=1e-1, rtol=1e-1)
    assert jnp.allclose(sent_p16, r_sent_p, atol=5e-2, rtol=5e-2)
    assert jnp.allclose(word_ps16, r_word_ps, atol=5e-2, rtol=5e-2)

    print("KERNEL_OK")
</pallas_src>

<mosaic_0001>
module attributes {stable_mosaic.version = 11 : i64} {
  func.func @critic_kernel(%arg0: i32, %arg1: memref<8x16xf32, #tpu.memory_space<vmem>>, %arg2: memref<8x3x8x32xf32, #tpu.memory_space<vmem>>, %arg3: memref<8x3xi32, #tpu.memory_space<vmem>>, %arg4: memref<32x16xf32, #tpu.memory_space<vmem>>, %arg5: memref<16x16xf32, #tpu.memory_space<vmem>>, %arg6: memref<1x16xf32, #tpu.memory_space<vmem>>, %arg7: memref<1x16xf32, #tpu.memory_space<vmem>>, %arg8: memref<32x16xf32, #tpu.memory_space<vmem>>, %arg9: memref<16x16xf32, #tpu.memory_space<vmem>>, %arg10: memref<1x16xf32, #tpu.memory_space<vmem>>, %arg11: memref<1x16xf32, #tpu.memory_space<vmem>>, %arg12: memref<32x32xf32, #tpu.memory_space<vmem>>, %arg13: memref<16x32xf32, #tpu.memory_space<vmem>>, %arg14: memref<1x32xf32, #tpu.memory_space<vmem>>, %arg15: memref<32x1xf32, #tpu.memory_space<vmem>>, %arg16: memref<3xf32, #tpu.memory_space<smem>>, %arg17: memref<8x128xf32, #tpu.memory_space<vmem>>) attributes {dimension_semantics = [#tpu.dimension_semantics<parallel>], iteration_bounds = array<i64: 1>, scalar_prefetch = 0 : i64, scratch_operands = 0 : i64, tpu.core_type = #tpu.core_type<tc>, window_params = [{transform_indices = @transform_0, window_bounds = array<i64: 8, 16>}, {transform_indices = @transform_1, window_bounds = array<i64: 8, 3, 8, 32>}, {transform_indices = @transform_2, window_bounds = array<i64: 8, 3>}, {pipeline_mode = #tpu.pipeline_mode<synchronous>, transform_indices = @transform_3, window_bounds = array<i64: 32, 16>}, {pipeline_mode = #tpu.pipeline_mode<synchronous>, transform_indices = @transform_4, window_bounds = array<i64: 16, 16>}, {pipeline_mode = #tpu.pipeline_mode<synchronous>, transform_indices = @transform_5, window_bounds = array<i64: 1, 16>}, {pipeline_mode = #tpu.pipeline_mode<synchronous>, transform_indices = @transform_6, window_bounds = array<i64: 1, 16>}, {pipeline_mode = #tpu.pipeline_mode<synchronous>, transform_indices = @transform_7, window_bounds = array<i64: 32, 16>}, {pipeline_mode = #tpu.pipeline_mode<synchronous>, transform_indices = @transform_8, window_bounds = array<i64: 16, 16>}, {pipeline_mode = #tpu.pipeline_mode<synchronous>, transform_indices = @transform_9, window_bounds = array<i64: 1, 16>}, {pipeline_mode = #tpu.pipeline_mode<synchronous>, transform_indices = @transform_10, window_bounds = array<i64: 1, 16>}, {pipeline_mode = #tpu.pipeline_mode<synchronous>, transform_indices = @transform_11, window_bounds = array<i64: 32, 32>}, {pipeline_mode = #tpu.pipeline_mode<synchronous>, transform_indices = @transform_12, window_bounds = array<i64: 16, 32>}, {pipeline_mode = #tpu.pipeline_mode<synchronous>, transform_indices = @transform_13, window_bounds = array<i64: 1, 32>}, {pipeline_mode = #tpu.pipeline_mode<synchronous>, transform_indices = @transform_14, window_bounds = array<i64: 32, 1>}, {transform_indices = @transform_15, window_bounds = array<i64: 3>}, {transform_indices = @transform_16, window_bounds = array<i64: 8, 128>}]} {
    %c0 = arith.constant 0 : index
    %c0_0 = arith.constant 0 : index
    %0 = vector.load %arg1[%c0, %c0_0] : memref<8x16xf32, #tpu.memory_space<vmem>>, vector<8x16xf32>
    %c0_1 = arith.constant 0 : index
    %c0_2 = arith.constant 0 : index
    %c0_3 = arith.constant 0 : index
    %c0_4 = arith.constant 0 : index
    %1 = vector.load %arg2[%c0_1, %c0_2, %c0_3, %c0_4] : memref<8x3x8x32xf32, #tpu.memory_space<vmem>>, vector<8x3x8x32xf32>
    %c0_5 = arith.constant 0 : index
    %c0_6 = arith.constant 0 : index
    %2 = vector.load %arg3[%c0_5, %c0_6] : memref<8x3xi32, #tpu.memory_space<vmem>>, vector<8x3xi32>
    %c0_7 = arith.constant 0 : index
    %3 = memref.load %arg16[%c0_7] : memref<3xf32, #tpu.memory_space<smem>>
    %c1 = arith.constant 1 : index
    %4 = memref.load %arg16[%c1] : memref<3xf32, #tpu.memory_space<smem>>
    %c2 = arith.constant 2 : index
    %5 = memref.load %arg16[%c2] : memref<3xf32, #tpu.memory_space<smem>>
    %6 = vector.shape_cast %1 : vector<8x3x8x32xf32> to vector<192x32xf32>
    %c0_8 = arith.constant 0 : index
    %c0_9 = arith.constant 0 : index
    %7 = vector.load %arg4[%c0_8, %c0_9] : memref<32x16xf32, #tpu.memory_space<vmem>>, vector<32x16xf32>
    %cst = arith.constant dense<0.000000e+00> : vector<192x16xf32>
    %8 = tpu.matmul %6, %7, %cst {dimension_numbers = #tpu.dot_dimension_numbers<[1], [0], [0], [1], [0, 0, 1, 1], [], []>} : vector<192x32xf32>, vector<32x16xf32>, vector<192x16xf32> -> vector<192x16xf32>
    %9 = vector.shape_cast %8 : vector<192x16xf32> to vector<8x3x8x16xf32>
    %c0_10 = arith.constant 0 : index
    %c0_11 = arith.constant 0 : index
    %10 = vector.load %arg5[%c0_10, %c0_11] : memref<16x16xf32, #tpu.memory_space<vmem>>, vector<16x16xf32>
    %cst_12 = arith.constant dense<0.000000e+00> : vector<8x16xf32>
    %11 = tpu.matmul %0, %10, %cst_12 {dimension_numbers = #tpu.dot_dimension_numbers<[1], [0], [0], [1], [0, 0, 1, 1], [], []>} : vector<8x16xf32>, vector<16x16xf32>, vector<8x16xf32> -> vector<8x16xf32>
    %c0_13 = arith.constant 0 : index
    %c0_14 = arith.constant 0 : index
    %12 = vector.load %arg6[%c0_13, %c0_14] : memref<1x16xf32, #tpu.memory_space<vmem>>, vector<1x16xf32>
    %13 = vector.broadcast %12 : vector<1x16xf32> to vector<8x16xf32>
    %14 = arith.addf %11, %13 : vector<8x16xf32>
    %15 = vector.shape_cast %14 : vector<8x16xf32> to vector<8x1x1x16xf32>
    %16 = vector.broadcast %15 : vector<8x1x1x16xf32> to vector<8x3x8x16xf32>
    %17 = arith.addf %9, %16 : vector<8x3x8x16xf32>
    %18 = math.tanh %17 : vector<8x3x8x16xf32>
    %c0_15 = arith.constant 0 : index
    %c0_16 = arith.constant 0 : index
    %19 = vector.load %arg7[%c0_15, %c0_16] : memref<1x16xf32, #tpu.memory_space<vmem>>, vector<1x16xf32>
    %20 = vector.shape_cast %19 : vector<1x16xf32> to vector<1x1x1x16xf32>
    %21 = vector.broadcast %20 : vector<1x1x1x16xf32> to vector<8x3x8x16xf32>
    %22 = arith.mulf %18, %21 : vector<8x3x8x16xf32>
    %cst_17 = arith.constant dense<0.000000e+00> : vector<8x3x8xf32>
    %23 = vector.multi_reduction <add>, %22, %cst_17 [3] : vector<8x3x8x16xf32> to vector<8x3x8xf32>
    %24 = vector.broadcast %3 : f32 to vector<8x3x8xf32>
    %25 = arith.addf %23, %24 : vector<8x3x8xf32>
    %26 = tpu.iota {dimensions = array<i32: 2>} : vector<8x3x8xi32>
    %27 = vector.shape_cast %2 : vector<8x3xi32> to vector<8x3x1xi32>
    %28 = vector.broadcast %27 : vector<8x3x1xi32> to vector<8x3x8xi32>
    %29 = arith.cmpi slt, %26, %28 : vector<8x3x8xi32>
    %30 = arith.extui %29 : vector<8x3x8xi1> to vector<8x3x8xi32>
    %31 = arith.sitofp %30 : vector<8x3x8xi32> to vector<8x3x8xf32>
    %cst_18 = arith.constant 0.000000e+00 : f32
    %32 = vector.broadcast %cst_18 : f32 to vector<8x3x8xf32>
    %33 = arith.cmpf ogt, %31, %32 : vector<8x3x8xf32>
    %cst_19 = arith.constant -1.000000e+30 : f32
    %34 = vector.broadcast %cst_19 : f32 to vector<8x3x8xf32>
    %35 = arith.select %33, %25, %34 : vector<8x3x8xi1>, vector<8x3x8xf32>
    %cst_20 = arith.constant dense<0xFF800000> : vector<8x3xf32>
    %36 = vector.multi_reduction <maximumf>, %35, %cst_20 [2] : vector<8x3x8xf32> to vector<8x3xf32>
    %37 = vector.shape_cast %36 : vector<8x3xf32> to vector<8x3x1xf32>
    %38 = vector.broadcast %37 : vector<8x3x1xf32> to vector<8x3x8xf32>
    %39 = arith.subf %35, %38 : vector<8x3x8xf32>
    %40 = math.exp %39 : vector<8x3x8xf32>
    %41 = arith.mulf %40, %31 : vector<8x3x8xf32>
    %cst_21 = arith.constant dense<0.000000e+00> : vector<8x3xf32>
    %42 = vector.multi_reduction <add>, %41, %cst_21 [2] : vector<8x3x8xf32> to vector<8x3xf32>
    %43 = vector.shape_cast %42 : vector<8x3xf32> to vector<8x3x1xf32>
    %cst_22 = arith.constant 1.000000e-30 : f32
    %44 = vector.broadcast %cst_22 : f32 to vector<8x3x1xf32>
    %45 = arith.maximumf %43, %44 : vector<8x3x1xf32>
    %46 = vector.broadcast %45 : vector<8x3x1xf32> to vector<8x3x8xf32>
    %47 = arith.divf %41, %46 : vector<8x3x8xf32>
    %48 = vector.shape_cast %47 : vector<8x3x8xf32> to vector<8x3x8x1xf32>
    %49 = vector.broadcast %48 : vector<8x3x8x1xf32> to vector<8x3x8x32xf32>
    %50 = arith.mulf %49, %1 : vector<8x3x8x32xf32>
    %cst_23 = arith.constant dense<0.000000e+00> : vector<8x3x32xf32>
    %51 = vector.multi_reduction <add>, %50, %cst_23 [2] : vector<8x3x8x32xf32> to vector<8x3x32xf32>
    %52 = vector.shape_cast %51 : vector<8x3x32xf32> to vector<24x32xf32>
    %c0_24 = arith.constant 0 : index
    %c0_25 = arith.constant 0 : index
    %53 = vector.load %arg8[%c0_24, %c0_25] : memref<32x16xf32, #tpu.memory_space<vmem>>, vector<32x16xf32>
    %cst_26 = arith.constant dense<0.000000e+00> : vector<24x16xf32>
    %54 = tpu.matmul %52, %53, %cst_26 {dimension_numbers = #tpu.dot_dimension_numbers<[1], [0], [0], [1], [0, 0, 1, 1], [], []>} : vector<24x32xf32>, vector<32x16xf32>, vector<24x16xf32> -> vector<24x16xf32>
    %55 = vector.shape_cast %54 : vector<24x16xf32> to vector<8x3x16xf32>
    %c0_27 = arith.constant 0 : index
    %c0_28 = arith.constant 0 : index
    %56 = vector.load %arg9[%c0_27, %c0_28] : memref<16x16xf32, #tpu.memory_space<vmem>>, vector<16x16xf32>
    %cst_29 = arith.constant dense<0.000000e+00> : vector<8x16xf32>
    %57 = tpu.matmul %0, %56, %cst_29 {dimension_numbers = #tpu.dot_dimension_numbers<[1], [0], [0], [1], [0, 0, 1, 1], [], []>} : vector<8x16xf32>, vector<16x16xf32>, vector<8x16xf32> -> vector<8x16xf32>
    %c0_30 = arith.constant 0 : index
    %c0_31 = arith.constant 0 : index
    %58 = vector.load %arg10[%c0_30, %c0_31] : memref<1x16xf32, #tpu.memory_space<vmem>>, vector<1x16xf32>
    %59 = vector.broadcast %58 : vector<1x16xf32> to vector<8x16xf32>
    %60 = arith.addf %57, %59 : vector<8x16xf32>
    %61 = vector.shape_cast %60 : vector<8x16xf32> to vector<8x1x16xf32>
    %62 = vector.broadcast %61 : vector<8x1x16xf32> to vector<8x3x16xf32>
    %63 = arith.addf %55, %62 : vector<8x3x16xf32>
    %64 = math.tanh %63 : vector<8x3x16xf32>
    %c0_32 = arith.constant 0 : index
    %c0_33 = arith.constant 0 : index
    %65 = vector.load %arg11[%c0_32, %c0_33] : memref<1x16xf32, #tpu.memory_space<vmem>>, vector<1x16xf32>
    %66 = vector.shape_cast %65 : vector<1x16xf32> to vector<1x1x16xf32>
    %67 = vector.broadcast %66 : vector<1x1x16xf32> to vector<8x3x16xf32>
    %68 = arith.mulf %64, %67 : vector<8x3x16xf32>
    %cst_34 = arith.constant dense<0.000000e+00> : vector<8x3xf32>
    %69 = vector.multi_reduction <add>, %68, %cst_34 [2] : vector<8x3x16xf32> to vector<8x3xf32>
    %70 = vector.broadcast %4 : f32 to vector<8x3xf32>
    %71 = arith.addf %69, %70 : vector<8x3xf32>
    %cst_35 = arith.constant dense<0xFF800000> : vector<8xf32>
    %72 = vector.multi_reduction <maximumf>, %71, %cst_35 [1] : vector<8x3xf32> to vector<8xf32>
    %73 = vector.shape_cast %72 : vector<8xf32> to vector<8x1xf32>
    %74 = vector.broadcast %73 : vector<8x1xf32> to vector<8x3xf32>
    %75 = arith.subf %71, %74 : vector<8x3xf32>
    %76 = math.exp %75 : vector<8x3xf32>
    %cst_36 = arith.constant dense<0.000000e+00> : vector<8xf32>
    %77 = vector.multi_reduction <add>, %76, %cst_36 [1] : vector<8x3xf32> to vector<8xf32>
    %78 = vector.shape_cast %77 : vector<8xf32> to vector<8x1xf32>
    %79 = vector.broadcast %78 : vector<8x1xf32> to vector<8x3xf32>
    %80 = arith.divf %76, %79 : vector<8x3xf32>
    %81 = vector.shape_cast %80 : vector<8x3xf32> to vector<8x3x1xf32>
    %82 = vector.broadcast %81 : vector<8x3x1xf32> to vector<8x3x32xf32>
    %83 = arith.mulf %82, %51 : vector<8x3x32xf32>
    %cst_37 = arith.constant dense<0.000000e+00> : vector<8x32xf32>
    %84 = vector.multi_reduction <add>, %83, %cst_37 [1] : vector<8x3x32xf32> to vector<8x32xf32>
    %c0_38 = arith.constant 0 : index
    %c0_39 = arith.constant 0 : index
    %85 = vector.load %arg12[%c0_38, %c0_39] : memref<32x32xf32, #tpu.memory_space<vmem>>, vector<32x32xf32>
    %cst_40 = arith.constant dense<0.000000e+00> : vector<8x32xf32>
    %86 = tpu.matmul %84, %85, %cst_40 {dimension_numbers = #tpu.dot_dimension_numbers<[1], [0], [0], [1], [0, 0, 1, 1], [], []>} : vector<8x32xf32>, vector<32x32xf32>, vector<8x32xf32> -> vector<8x32xf32>
    %c0_41 = arith.constant 0 : index
    %c0_42 = arith.constant 0 : index
    %87 = vector.load %arg13[%c0_41, %c0_42] : memref<16x32xf32, #tpu.memory_space<vmem>>, vector<16x32xf32>
    %cst_43 = arith.constant dense<0.000000e+00> : vector<8x32xf32>
    %88 = tpu.matmul %0, %87, %cst_43 {dimension_numbers = #tpu.dot_dimension_numbers<[1], [0], [0], [1], [0, 0, 1, 1], [], []>} : vector<8x16xf32>, vector<16x32xf32>, vector<8x32xf32> -> vector<8x32xf32>
    %89 = arith.addf %86, %88 : vector<8x32xf32>
    %c0_44 = arith.constant 0 : index
    %c0_45 = arith.constant 0 : index
    %90 = vector.load %arg14[%c0_44, %c0_45] : memref<1x32xf32, #tpu.memory_space<vmem>>, vector<1x32xf32>
    %91 = vector.broadcast %90 : vector<1x32xf32> to vector<8x32xf32>
    %92 = arith.addf %89, %91 : vector<8x32xf32>
    %93 = math.tanh %92 : vector<8x32xf32>
    %c0_46 = arith.constant 0 : index
    %c0_47 = arith.constant 0 : index
    %94 = vector.load %arg15[%c0_46, %c0_47] : memref<32x1xf32, #tpu.memory_space<vmem>>, vector<32x1xf32>
    %cst_48 = arith.constant dense<0.000000e+00> : vector<8x1xf32>
    %95 = tpu.matmul %93, %94, %cst_48 {dimension_numbers = #tpu.dot_dimension_numbers<[1], [0], [0], [1], [0, 0, 1, 1], [], []>} : vector<8x32xf32>, vector<32x1xf32>, vector<8x1xf32> -> vector<8x1xf32>
    %96 = vector.broadcast %5 : f32 to vector<8x1xf32>
    %97 = arith.addf %95, %96 : vector<8x1xf32>
    %98 = vector.extract_strided_slice %47 {offsets = [0, 0, 0], sizes = [8, 1, 8], strides = [1, 1, 1]} : vector<8x3x8xf32> to vector<8x1x8xf32>
    %99 = vector.shape_cast %98 : vector<8x1x8xf32> to vector<8x8xf32>
    %100 = vector.extract_strided_slice %47 {offsets = [0, 1, 0], sizes = [8, 1, 8], strides = [1, 1, 1]} : vector<8x3x8xf32> to vector<8x1x8xf32>
    %101 = vector.shape_cast %100 : vector<8x1x8xf32> to vector<8x8xf32>
    %102 = vector.extract_strided_slice %47 {offsets = [0, 2, 0], sizes = [8, 1, 8], strides = [1, 1, 1]} : vector<8x3x8xf32> to vector<8x1x8xf32>
    %103 = vector.shape_cast %102 : vector<8x1x8xf32> to vector<8x8xf32>
    %cst_49 = arith.constant 0.000000e+00 : f32
    %104 = vector.broadcast %cst_49 : f32 to vector<8x100xf32>
    %105 = tpu.concatenate %97, %80, %99, %101, %103, %104 in 1 : vector<8x1xf32>, vector<8x3xf32>, vector<8x8xf32>, vector<8x8xf32>, vector<8x8xf32>, vector<8x100xf32> -> vector<8x128xf32>
    %c0_50 = arith.constant 0 : index
    %c0_51 = arith.constant 0 : index
    %106 = vector.load %arg17[%c0_50, %c0_51] : memref<8x128xf32, #tpu.memory_space<vmem>>, vector<8x128xf32>
    tpu.vector_store %arg17[%c0_50, %c0_51], %105 {strides = array<i32>} : memref<8x128xf32, #tpu.memory_space<vmem>>, vector<8x128xf32>,
    return
  }
  func.func @transform_0(%arg0: i32) -> (i32, i32) {
    %c0_i32 = arith.constant 0 : i32
    %c0_i32_0 = arith.constant 0 : i32
    return %arg0, %c0_i32 : i32, i32
  }
  func.func @transform_1(%arg0: i32) -> (i32, i32, i32, i32) {
    %c0_i32 = arith.constant 0 : i32
    %c0_i32_0 = arith.constant 0 : i32
    %c0_i32_1 = arith.constant 0 : i32
    %c0_i32_2 = arith.constant 0 : i32
    return %arg0, %c0_i32, %c0_i32_0, %c0_i32_1 : i32, i32, i32, i32
  }
  func.func @transform_2(%arg0: i32) -> (i32, i32) {
    %c0_i32 = arith.constant 0 : i32
    %c0_i32_0 = arith.constant 0 : i32
    return %arg0, %c0_i32 : i32, i32
  }
  func.func @transform_3(%arg0: i32) -> (i32, i32) {
    %c0_i32 = arith.constant 0 : i32
    %c0_i32_0 = arith.constant 0 : i32
    %c0_i32_1 = arith.constant 0 : i32
    return %c0_i32, %c0_i32_0 : i32, i32
  }
  func.func @transform_4(%arg0: i32) -> (i32, i32) {
    %c0_i32 = arith.constant 0 : i32
    %c0_i32_0 = arith.constant 0 : i32
    %c0_i32_1 = arith.constant 0 : i32
    return %c0_i32, %c0_i32_0 : i32, i32
  }
  func.func @transform_5(%arg0: i32) -> (i32, i32) {
    %c0_i32 = arith.constant 0 : i32
    %c0_i32_0 = arith.constant 0 : i32
    %c0_i32_1 = arith.constant 0 : i32
    return %c0_i32, %c0_i32_0 : i32, i32
  }
  func.func @transform_6(%arg0: i32) -> (i32, i32) {
    %c0_i32 = arith.constant 0 : i32
    %c0_i32_0 = arith.constant 0 : i32
    %c0_i32_1 = arith.constant 0 : i32
    return %c0_i32, %c0_i32_0 : i32, i32
  }
  func.func @transform_7(%arg0: i32) -> (i32, i32) {
    %c0_i32 = arith.constant 0 : i32
    %c0_i32_0 = arith.constant 0 : i32
    %c0_i32_1 = arith.constant 0 : i32
    return %c0_i32, %c0_i32_0 : i32, i32
  }
  func.func @transform_8(%arg0: i32) -> (i32, i32) {
    %c0_i32 = arith.constant 0 : i32
    %c0_i32_0 = arith.constant 0 : i32
    %c0_i32_1 = arith.constant 0 : i32
    return %c0_i32, %c0_i32_0 : i32, i32
  }
  func.func @transform_9(%arg0: i32) -> (i32, i32) {
    %c0_i32 = arith.constant 0 : i32
    %c0_i32_0 = arith.constant 0 : i32
    %c0_i32_1 = arith.constant 0 : i32
    return %c0_i32, %c0_i32_0 : i32, i32
  }
  func.func @transform_10(%arg0: i32) -> (i32, i32) {
    %c0_i32 = arith.constant 0 : i32
    %c0_i32_0 = arith.constant 0 : i32
    %c0_i32_1 = arith.constant 0 : i32
    return %c0_i32, %c0_i32_0 : i32, i32
  }
  func.func @transform_11(%arg0: i32) -> (i32, i32) {
    %c0_i32 = arith.constant 0 : i32
    %c0_i32_0 = arith.constant 0 : i32
    %c0_i32_1 = arith.constant 0 : i32
    return %c0_i32, %c0_i32_0 : i32, i32
  }
  func.func @transform_12(%arg0: i32) -> (i32, i32) {
    %c0_i32 = arith.constant 0 : i32
    %c0_i32_0 = arith.constant 0 : i32
    %c0_i32_1 = arith.constant 0 : i32
    return %c0_i32, %c0_i32_0 : i32, i32
  }
  func.func @transform_13(%arg0: i32) -> (i32, i32) {
    %c0_i32 = arith.constant 0 : i32
    %c0_i32_0 = arith.constant 0 : i32
    %c0_i32_1 = arith.constant 0 : i32
    return %c0_i32, %c0_i32_0 : i32, i32
  }
  func.func @transform_14(%arg0: i32) -> (i32, i32) {
    %c0_i32 = arith.constant 0 : i32
    %c0_i32_0 = arith.constant 0 : i32
    %c0_i32_1 = arith.constant 0 : i32
    return %c0_i32, %c0_i32_0 : i32, i32
  }
  func.func @transform_15(%arg0: i32) -> i32 {
    %c0_i32 = arith.constant 0 : i32
    %c0_i32_0 = arith.constant 0 : i32
    return %c0_i32 : i32
  }
  func.func @transform_16(%arg0: i32) -> (i32, i32) {
    %c0_i32 = arith.constant 0 : i32
    %c0_i32_0 = arith.constant 0 : i32
    return %arg0, %c0_i32 : i32, i32
  }
}

</mosaic_0001>

<llo_original>
// kernel: tpu_custom_call.1
$region0: #{tpu_custom_call.1}
  #allocation0 [shape = 'u32[]', space=smem, size = 0x4, offset = 0x4, fixed_abs, tag = 'smem constant byte address 0x4 - core index']
  #allocation1 [shape = 'u32[144,128]{1,0:T(1,128)}', space=vmem, size = 0x12000, scoped, tag = 'internal scratch']
  %s0 = inlined_call_operand.vmem [shape: f32[8,16], index: 0, kind: input, shape index: {}]
  %s1 = inlined_call_operand.hbm [shape: f32[8,3,8,32], index: 1, kind: input, shape index: {}]
  %s2 = inlined_call_operand.vmem [shape: s32[8,3], index: 2, kind: input, shape index: {}]
  %s3 = inlined_call_operand.vmem [shape: f32[32,16], index: 3, kind: input, shape index: {}]
  %s4 = inlined_call_operand.vmem [shape: f32[16,16], index: 4, kind: input, shape index: {}]
  %s5 = inlined_call_operand.vmem [shape: f32[1,16], index: 5, kind: input, shape index: {}]
  %s6 = inlined_call_operand.vmem [shape: f32[1,16], index: 6, kind: input, shape index: {}]
  %s7 = inlined_call_operand.vmem [shape: f32[32,16], index: 7, kind: input, shape index: {}]
  %s8 = inlined_call_operand.vmem [shape: f32[16,16], index: 8, kind: input, shape index: {}]
  %s9 = inlined_call_operand.vmem [shape: f32[1,16], index: 9, kind: input, shape index: {}]
  %s10 = inlined_call_operand.vmem [shape: f32[1,16], index: 10, kind: input, shape index: {}]
  %s11 = inlined_call_operand.vmem [shape: f32[32,32], index: 11, kind: input, shape index: {}]
  %s12 = inlined_call_operand.vmem [shape: f32[16,32], index: 12, kind: input, shape index: {}]
  %s13 = inlined_call_operand.vmem [shape: f32[1,32], index: 13, kind: input, shape index: {}]
  %s14 = inlined_call_operand.vmem [shape: f32[32,1], index: 14, kind: input, shape index: {}]
  %s15 = inlined_call_operand.vmem [shape: f32[3], index: 15, kind: input, shape index: {}]
  %s16 = inlined_call_operand.hbm [shape: f32[8,128], index: 16, kind: output, shape index: {}]
  %s17 = sld [smem:[#allocation0]]
  $region82: #{tpu_custom_call.1} parent=0
    _
  %s19 = ssub.s32 1, %s17
  %s20 = scalar_select 0, %s19, %s17
  $region1: #{tpu_custom_call.1} parent=0
    #allocation2 [shape = 'u8[98304]{0}', space=vmem, size = 0x18000, scoped, tag = 'input window, operand 1, single buffered']
    #allocation3 [shape = 's32[1]{0}', space=sflag, size = 0x4, scoped, tag = 'scoped memory for tpu_custom_call.1']
    #allocation4 [shape = 's32[1]{0}', space=sflag, size = 0x4, scoped, tag = 'scoped memory for tpu_custom_call.1']
    #allocation5 [shape = 's32[1]{0}', space=sflag, size = 0x4, scoped, tag = 'scoped memory for tpu_custom_call.1']
    #allocation6 [shape = 'u8[512]{0}', space=smem, size = 0x200, scoped, tag = 'input window, operand 15, single buffered']
    #allocation7 [shape = 'u8[4096]{0}', space=vmem, size = 0x1000, scoped, tag = 'output window, operand 0, single buffered']
    %21 = vsyncpa [#allocation3], 0
    %22 = vsyncpa [#allocation5], 0
    %23 = vsyncpa [#allocation4], 0
    // Predicated region
    $region2: #{tpu_custom_call.1} parent=1 // pred_check
      _
    $region3: #{tpu_custom_call.1} parent=1 // pred_check_branch
      %25 = sbr.rel (0) target = $region5
    $region4: #{tpu_custom_call.1} parent=1 // pred_region
      _
    $region5: #{tpu_custom_call.1} parent=1 // pred_fallthru
      _
    // Predicated region
    $region6: #{tpu_custom_call.1} parent=1 // pred_check
      _
    $region7: #{tpu_custom_call.1} parent=1 // pred_check_branch
      %27 = sbr.rel (0) target = $region9
    $region8: #{tpu_custom_call.1} parent=1 // pred_region
      %s29 = ssub.s32 3072, 3072
      %30 = vsyncadd [#allocation3], %s29
      %s31 = sshll.u32 [#allocation2], 4
      %s32 = int_to_ptr.vmem [resolvable:$true] %s31
      %37 = dma.hbm_to_vmem [thread:$0]  %s1, 3072, %s32, [#allocation3], 128, 128, 8
    $region9: #{tpu_custom_call.1} parent=1 // pred_fallthru
      _
    // Predicated region
    $region10: #{tpu_custom_call.1} parent=1 // pred_check
      _
    $region11: #{tpu_custom_call.1} parent=1 // pred_check_branch
      %39 = sbr.rel (0) target = $region13
    $region12: #{tpu_custom_call.1} parent=1 // pred_region
      _
    $region13: #{tpu_custom_call.1} parent=1 // pred_fallthru
      _
    // Predicated region
    $region14: #{tpu_custom_call.1} parent=1 // pred_check
      _
    $region15: #{tpu_custom_call.1} parent=1 // pred_check_branch
      %41 = sbr.rel (0) target = $region17
    $region16: #{tpu_custom_call.1} parent=1 // pred_region
      _
    $region17: #{tpu_custom_call.1} parent=1 // pred_fallthru
      _
    // Predicated region
    $region18: #{tpu_custom_call.1} parent=1 // pred_check
      _
    $region19: #{tpu_custom_call.1} parent=1 // pred_check_branch
      %43 = sbr.rel (0) target = $region21
    $region20: #{tpu_custom_call.1} parent=1 // pred_region
      _
    $region21: #{tpu_custom_call.1} parent=1 // pred_fallthru
      _
    // Predicated region
    $region22: #{tpu_custom_call.1} parent=1 // pred_check
      _
    $region23: #{tpu_custom_call.1} parent=1 // pred_check_branch
      %45 = sbr.rel (0) target = $region25
    $region24: #{tpu_custom_call.1} parent=1 // pred_region
      _
    $region25: #{tpu_custom_call.1} parent=1 // pred_fallthru
      _
    // Predicated region
    $region26: #{tpu_custom_call.1} parent=1 // pred_check
      _
    $region27: #{tpu_custom_call.1} parent=1 // pred_check_branch
      %47 = sbr.rel (0) target = $region29
    $region28: #{tpu_custom_call.1} parent=1 // pred_region
      _
    $region29: #{tpu_custom_call.1} parent=1 // pred_fallthru
      _
    // Predicated region
    $region30: #{tpu_custom_call.1} parent=1 // pred_check
      _
    $region31: #{tpu_custom_call.1} parent=1 // pred_check_branch
      %49 = sbr.rel (0) target = $region33
    $region32: #{tpu_custom_call.1} parent=1 // pred_region
      _
    $region33: #{tpu_custom_call.1} parent=1 // pred_fallthru
      _
    // Predicated region
    $region34: #{tpu_custom_call.1} parent=1 // pred_check
      _
    $region35: #{tpu_custom_call.1} parent=1 // pred_check_branch
      %51 = sbr.rel (0) target = $region37
    $region36: #{tpu_custom_call.1} parent=1 // pred_region
      _
    $region37: #{tpu_custom_call.1} parent=1 // pred_fallthru
      _
    // Predicated region
    $region38: #{tpu_custom_call.1} parent=1 // pred_check
      _
    $region39: #{tpu_custom_call.1} parent=1 // pred_check_branch
      %53 = sbr.rel (0) target = $region41
    $region40: #{tpu_custom_call.1} parent=1 // pred_region
      _
    $region41: #{tpu_custom_call.1} parent=1 // pred_fallthru
      _
    // Predicated region
    $region42: #{tpu_custom_call.1} parent=1 // pred_check
      _
    $region43: #{tpu_custom_call.1} parent=1 // pred_check_branch
      %55 = sbr.rel (0) target = $region45
    $region44: #{tpu_custom_call.1} parent=1 // pred_region
      _
    $region45: #{tpu_custom_call.1} parent=1 // pred_fallthru
      _
    // Predicated region
    $region46: #{tpu_custom_call.1} parent=1 // pred_check
      _
    $region47: #{tpu_custom_call.1} parent=1 // pred_check_branch
      %57 = sbr.rel (0) target = $region49
    $region48: #{tpu_custom_call.1} parent=1 // pred_region
      _
    $region49: #{tpu_custom_call.1} parent=1 // pred_fallthru
      _
    // Predicated region
    $region50: #{tpu_custom_call.1} parent=1 // pred_check
      _
    $region51: #{tpu_custom_call.1} parent=1 // pred_check_branch
      %59 = sbr.rel (0) target = $region53
    $region52: #{tpu_custom_call.1} parent=1 // pred_region
      _
    $region53: #{tpu_custom_call.1} parent=1 // pred_fallthru
      _
    // Predicated region
    $region54: #{tpu_custom_call.1} parent=1 // pred_check
      _
    $region55: #{tpu_custom_call.1} parent=1 // pred_check_branch
      %61 = sbr.rel (0) target = $region57
    $region56: #{tpu_custom_call.1} parent=1 // pred_region
      _
    $region57: #{tpu_custom_call.1} parent=1 // pred_fallthru
      _
    // Predicated region
    $region58: #{tpu_custom_call.1} parent=1 // pred_check
      _
    $region59: #{tpu_custom_call.1} parent=1 // pred_check_branch
      %63 = sbr.rel (0) target = $region61
    $region60: #{tpu_custom_call.1} parent=1 // pred_region
      _
    $region61: #{tpu_custom_call.1} parent=1 // pred_fallthru
      _
    // Predicated region
    $region62: #{tpu_custom_call.1} parent=1 // pred_check
      _
    $region63: #{tpu_custom_call.1} parent=1 // pred_check_branch
      %65 = sbr.rel (0) target = $region65
    $region64: #{tpu_custom_call.1} parent=1 // pred_region
      %s67 = ssub.s32 16, 16
      %68 = vsyncadd [#allocation5], %s67
      %s70 = sshll.u32 %s15, 4
      %s71 = int_to_ptr.vmem [resolvable:$true] %s70
      %73 = dma.vmem_to_smem %s71, 16, [#allocation6], [#allocation5]
    $region65: #{tpu_custom_call.1} parent=1 // pred_fallthru
      _
    // Predicated region
    $region66: #{tpu_custom_call.1} parent=1 // pred_check
      _
    $region67: #{tpu_custom_call.1} parent=1 // pred_check_branch
      %75 = sbr.rel (0) target = $region69
    $region68: #{tpu_custom_call.1} parent=1 // pred_region
      %76 = dma.done [#allocation3], 3072
    $region69: #{tpu_custom_call.1} parent=1 // pred_fallthru
      _
    // Predicated region
    $region70: #{tpu_custom_call.1} parent=1 // pred_check
      _
    $region71: #{tpu_custom_call.1} parent=1 // pred_check_branch
      %78 = sbr.rel (0) target = $region73
    $region72: #{tpu_custom_call.1} parent=1 // pred_region
      %79 = dma.done [#allocation5], 16
    $region73: #{tpu_custom_call.1} parent=1 // pred_fallthru
      _
    %80 = sfence
    %v81 = vld [vmem:[%s0] sm:$0xff]
    %v82 = vld [vmem:[#allocation2] sm:$0xff]
    %v83 = vld [vmem:[#allocation2 + $0x8] sm:$0xff]
    %v84 = vld [vmem:[#allocation2 + $0x10] sm:$0xff]
    %v85 = vld [vmem:[#allocation2 + $0x18] sm:$0xff]
    %v86 = vld [vmem:[#allocation2 + $0x20] sm:$0xff]
    %v87 = vld [vmem:[#allocation2 + $0x28] sm:$0xff]
    %v88 = vld [vmem:[#allocation2 + $0x30] sm:$0xff]
    %v89 = vld [vmem:[#allocation2 + $0x38] sm:$0xff]
    %v90 = vld [vmem:[#allocation2 + $0x40] sm:$0xff]
    %v91 = vld [vmem:[#allocation2 + $0x48] sm:$0xff]
    %v92 = vld [vmem:[#allocation2 + $0x50] sm:$0xff]
    %v93 = vld [vmem:[#allocation2 + $0x58] sm:$0xff]
    %v94 = vld [vmem:[#allocation2 + $0x60] sm:$0xff]
    %v95 = vld [vmem:[#allocation2 + $0x68] sm:$0xff]
    %v96 = vld [vmem:[#allocation2 + $0x70] sm:$0xff]
    %v97 = vld [vmem:[#allocation2 + $0x78] sm:$0xff]
    %v98 = vld [vmem:[#allocation2 + $0x80] sm:$0xff]
    %v99 = vld [vmem:[#allocation2 + $0x88] sm:$0xff]
    %v100 = vld [vmem:[#allocation2 + $0x90] sm:$0xff]
    %v101 = vld [vmem:[#allocation2 + $0x98] sm:$0xff]
    %v102 = vld [vmem:[#allocation2 + $0xa0] sm:$0xff]
    %v103 = vld [vmem:[#allocation2 + $0xa8] sm:$0xff]
    %v104 = vld [vmem:[#allocation2 + $0xb0] sm:$0xff]
    %v105 = vld [vmem:[#allocation2 + $0xb8] sm:$0xff]
    %v106 = vld [vmem:[%s2] sm:$0xff]
    %s107 = sld [smem:[#allocation6]]
    %s108 = sld [smem:[#allocation6 + $0x1]]
    %s109 = sld [smem:[#allocation6 + $0x2]]
    %v110 = vld [vmem:[%s3] sm:$0xff]
    %v111 = vld [vmem:[%s3 + $0x8] sm:$0xff]
    %v112 = vld [vmem:[%s3 + $0x10] sm:$0xff]
    %v113 = vld [vmem:[%s3 + $0x18] sm:$0xff]
    %vm114 = vcmask 261120
    %v116 = vsel %vm114, %v82, 0
    %v119 = vsel %vm114, %v83, 0
    %v122 = vsel %vm114, %v84, 0
    %v125 = vsel %vm114, %v85, 0
    %v128 = vsel %vm114, %v86, 0
    %v131 = vsel %vm114, %v87, 0
    %v134 = vsel %vm114, %v88, 0
    %v137 = vsel %vm114, %v89, 0
    %v140 = vsel %vm114, %v90, 0
    %v143 = vsel %vm114, %v91, 0
    %v146 = vsel %vm114, %v92, 0
    %v149 = vsel %vm114, %v93, 0
    %v152 = vsel %vm114, %v94, 0
    %v155 = vsel %vm114, %v95, 0
    %v158 = vsel %vm114, %v96, 0
    %v161 = vsel %vm114, %v97, 0
    %v164 = vsel %vm114, %v98, 0
    %v167 = vsel %vm114, %v99, 0
    %v170 = vsel %vm114, %v100, 0
    %v173 = vsel %vm114, %v101, 0
    %v176 = vsel %vm114, %v102, 0
    %v179 = vsel %vm114, %v103, 0
    %v182 = vsel %vm114, %v104, 0
    %v185 = vsel %vm114, %v105, 0
    %187 = vmatprep.subr.mxu0 0.0
    %188 = vmatpush1.msra.mxu0 %v110
    %189 = vmatprep.subr.mxu0 0.0
    %190 = vmatpush1.msra.mxu0 %v111
    %191 = vmatprep.subr.mxu0 0.0
    %192 = vmatpush1.msra.mxu0 %v112
    %193 = vmatprep.subr.mxu0 0.0
    %194 = vmatpush1.msra.mxu0 %v113
    %195 = vmatprep.subr.mxu0 0.0
    %196 = vmatpush1.msra.mxu0 0.0
    %197 = vmatprep.subr.mxu0 0.0
    %198 = vmatpush1.msra.mxu0 0.0
    %199 = vmatprep.subr.mxu0 0.0
    %200 = vmatpush1.msra.mxu0 0.0
    %201 = vmatprep.subr.mxu0 0.0
    %202 = vmatpush1.msra.mxu0 0.0
    %203 = vmatprep.subr.mxu0 0.0
    %204 = vmatpush1.msra.mxu0 0.0
    %205 = vmatprep.subr.mxu0 0.0
    %206 = vmatpush1.msra.mxu0 0.0
    %207 = vmatprep.subr.mxu0 0.0
    %208 = vmatpush1.msra.mxu0 0.0
    %209 = vmatprep.subr.mxu0 0.0
    %210 = vmatpush1.msra.mxu0 0.0
    %211 = vmatprep.subr.mxu0 0.0
    %212 = vmatpush1.msra.mxu0 0.0
    %213 = vmatprep.subr.mxu0 0.0
    %214 = vmatpush1.msra.mxu0 0.0
    %215 = vmatprep.subr.mxu0 0.0
    %216 = vmatpush1.msra.mxu0 0.0
    %217 = vmatprep.subr.mxu0 0.0
    %218 = vmatpush1.msra.mxu0 0.0
    %219 = vmatprep.subr.mxu0 0.0
    %220 = vmatpush1.msra.mxu0 0.0
    %221 = vmatprep.subr.mxu0 0.0
    %222 = vmatpush1.msra.mxu0 0.0
    %223 = vmatprep.subr.mxu0 0.0
    %224 = vmatpush1.msra.mxu0 0.0
    %225 = vmatprep.subr.mxu0 0.0
    %226 = vmatpush1.msra.mxu0 0.0
    %227 = vmatprep.subr.mxu0 0.0
    %228 = vmatpush1.msra.mxu0 0.0
    %229 = vmatprep.subr.mxu0 0.0
    %230 = vmatpush1.msra.mxu0 0.0
    %231 = vmatprep.subr.mxu0 0.0
    %232 = vmatpush1.msra.mxu0 0.0
    %233 = vmatprep.subr.mxu0 0.0
    %234 = vmatpush1.msra.mxu0 0.0
    %235 = vmatprep.subr.mxu0 0.0
    %236 = vmatpush1.msra.mxu0 0.0
    %237 = vmatprep.subr.mxu0 0.0
    %238 = vmatpush1.msra.mxu0 0.0
    %239 = vmatprep.subr.mxu0 0.0
    %240 = vmatpush1.msra.mxu0 0.0
    %241 = vmatprep.subr.mxu0 0.0
    %242 = vmatpush1.msra.mxu0 0.0
    %243 = vmatprep.subr.mxu0 0.0
    %244 = vmatpush1.msra.mxu0 0.0
    %245 = vmatprep.subr.mxu0 0.0
    %246 = vmatpush1.msra.mxu0 0.0
    %247 = vmatprep.subr.mxu0 0.0
    %248 = vmatpush1.msra.mxu0 0.0
    %249 = vmatprep.subr.mxu0 0.0
    %250 = vmatpush1.msra.mxu0 0.0
    %251 = vmatprep.mubr.f32.mxu0 0.0
    %252 = vmatmul.mubr.f32.gmra.mrb[0].mxu0 %v116
    %v253 = vpop.f32.mrb[0].mxu0
    %v254 = vadd.f32 0.0, %v253
    %v255 = vpop.f32.mrb[0].mxu0
    %256 = vmatprep.mubr.f32.mxu0 0.0
    %257 = vmatmul.mubr.f32.gmra.mrb[0].mxu0 %v119
    %v258 = vpop.f32.mrb[0].mxu0
    %v259 = vadd.f32 0.0, %v258
    %v260 = vpop.f32.mrb[0].mxu0
    %261 = vmatprep.mubr.f32.mxu0 0.0
    %262 = vmatmul.mubr.f32.gmra.mrb[0].mxu0 %v122
    %v263 = vpop.f32.mrb[0].mxu0
    %v264 = vadd.f32 0.0, %v263
    %v265 = vpop.f32.mrb[0].mxu0
    %266 = vmatprep.mubr.f32.mxu0 0.0
    %267 = vmatmul.mubr.f32.gmra.mrb[0].mxu0 %v125
    %v268 = vpop.f32.mrb[0].mxu0
    %v269 = vadd.f32 0.0, %v268
    %v270 = vpop.f32.mrb[0].mxu0
    %271 = vmatprep.mubr.f32.mxu0 0.0
    %272 = vmatmul.mubr.f32.gmra.mrb[0].mxu0 %v128
    %v273 = vpop.f32.mrb[0].mxu0
    %v274 = vadd.f32 0.0, %v273
    %v275 = vpop.f32.mrb[0].mxu0
    %276 = vmatprep.mubr.f32.mxu0 0.0
    %277 = vmatmul.mubr.f32.gmra.mrb[0].mxu0 %v131
    %v278 = vpop.f32.mrb[0].mxu0
    %v279 = vadd.f32 0.0, %v278
    %v280 = vpop.f32.mrb[0].mxu0
    %281 = vmatprep.mubr.f32.mxu0 0.0
    %282 = vmatmul.mubr.f32.gmra.mrb[0].mxu0 %v134
    %v283 = vpop.f32.mrb[0].mxu0
    %v284 = vadd.f32 0.0, %v283
    %v285 = vpop.f32.mrb[0].mxu0
    %286 = vmatprep.mubr.f32.mxu0 0.0
    %287 = vmatmul.mubr.f32.gmra.mrb[0].mxu0 %v137
    %v288 = vpop.f32.mrb[0].mxu0
    %v289 = vadd.f32 0.0, %v288
    %v290 = vpop.f32.mrb[0].mxu0
    %291 = vmatprep.mubr.f32.mxu0 0.0
    %292 = vmatmul.mubr.f32.gmra.mrb[0].mxu0 %v140
    %v293 = vpop.f32.mrb[0].mxu0
    %v294 = vadd.f32 0.0, %v293
    %v295 = vpop.f32.mrb[0].mxu0
    %296 = vmatprep.mubr.f32.mxu0 0.0
    %297 = vmatmul.mubr.f32.gmra.mrb[0].mxu0 %v143
    %v298 = vpop.f32.mrb[0].mxu0
    %v299 = vadd.f32 0.0, %v298
    %v300 = vpop.f32.mrb[0].mxu0
    %301 = vmatprep.mubr.f32.mxu0 0.0
    %302 = vmatmul.mubr.f32.gmra.mrb[0].mxu0 %v146
    %v303 = vpop.f32.mrb[0].mxu0
    %v304 = vadd.f32 0.0, %v303
    %v305 = vpop.f32.mrb[0].mxu0
    %306 = vmatprep.mubr.f32.mxu0 0.0
    %307 = vmatmul.mubr.f32.gmra.mrb[0].mxu0 %v149
    %v308 = vpop.f32.mrb[0].mxu0
    %v309 = vadd.f32 0.0, %v308
    %v310 = vpop.f32.mrb[0].mxu0
    %311 = vmatprep.mubr.f32.mxu0 0.0
    %312 = vmatmul.mubr.f32.gmra.mrb[0].mxu0 %v152
    %v313 = vpop.f32.mrb[0].mxu0
    %v314 = vadd.f32 0.0, %v313
    %v315 = vpop.f32.mrb[0].mxu0
    %316 = vmatprep.mubr.f32.mxu0 0.0
    %317 = vmatmul.mubr.f32.gmra.mrb[0].mxu0 %v155
    %v318 = vpop.f32.mrb[0].mxu0
    %v319 = vadd.f32 0.0, %v318
    %v320 = vpop.f32.mrb[0].mxu0
    %321 = vmatprep.mubr.f32.mxu0 0.0
    %322 = vmatmul.mubr.f32.gmra.mrb[0].mxu0 %v158
    %v323 = vpop.f32.mrb[0].mxu0
    %v324 = vadd.f32 0.0, %v323
    %v325 = vpop.f32.mrb[0].mxu0
    %326 = vmatprep.mubr.f32.mxu0 0.0
    %327 = vmatmul.mubr.f32.gmra.mrb[0].mxu0 %v161
    %v328 = vpop.f32.mrb[0].mxu0
    %v329 = vadd.f32 0.0, %v328
    %v330 = vpop.f32.mrb[0].mxu0
    %331 = vmatprep.mubr.f32.mxu0 0.0
    %332 = vmatmul.mubr.f32.gmra.mrb[0].mxu0 %v164
    %v333 = vpop.f32.mrb[0].mxu0
    %v334 = vadd.f32 0.0, %v333
    %v335 = vpop.f32.mrb[0].mxu0
    %336 = vmatprep.mubr.f32.mxu0 0.0
    %337 = vmatmul.mubr.f32.gmra.mrb[0].mxu0 %v167
    %v338 = vpop.f32.mrb[0].mxu0
    %v339 = vadd.f32 0.0, %v338
    %v340 = vpop.f32.mrb[0].mxu0
    %341 = vmatprep.mubr.f32.mxu0 0.0
    %342 = vmatmul.mubr.f32.gmra.mrb[0].mxu0 %v170
    %v343 = vpop.f32.mrb[0].mxu0
    %v344 = vadd.f32 0.0, %v343
    %v345 = vpop.f32.mrb[0].mxu0
    %346 = vmatprep.mubr.f32.mxu0 0.0
    %347 = vmatmul.mubr.f32.gmra.mrb[0].mxu0 %v173
    %v348 = vpop.f32.mrb[0].mxu0
    %v349 = vadd.f32 0.0, %v348
    %v350 = vpop.f32.mrb[0].mxu0
    %351 = vmatprep.mubr.f32.mxu0 0.0
    %352 = vmatmul.mubr.f32.gmra.mrb[0].mxu0 %v176
    %v353 = vpop.f32.mrb[0].mxu0
    %v354 = vadd.f32 0.0, %v353
    %v355 = vpop.f32.mrb[0].mxu0
    %356 = vmatprep.mubr.f32.mxu0 0.0
    %357 = vmatmul.mubr.f32.gmra.mrb[0].mxu0 %v179
    %v358 = vpop.f32.mrb[0].mxu0
    %v359 = vadd.f32 0.0, %v358
    %v360 = vpop.f32.mrb[0].mxu0
    %361 = vmatprep.mubr.f32.mxu0 0.0
    %362 = vmatmul.mubr.f32.gmra.mrb[0].mxu0 %v182
    %v363 = vpop.f32.mrb[0].mxu0
    %v364 = vadd.f32 0.0, %v363
    %v365 = vpop.f32.mrb[0].mxu0
    %366 = vmatprep.mubr.f32.mxu0 0.0
    %367 = vmatmul.mubr.f32.gmra.mrb[0].mxu0 %v185
    %v368 = vpop.f32.mrb[0].mxu0
    %v369 = vadd.f32 0.0, %v368
    %v370 = vpop.f32.mrb[0].mxu0
    %371 = vdwg.mxu0
    %v372 = vld [vmem:[%s4] sm:$0xff]
    %v373 = vld [vmem:[%s4 + $0x8] sm:$0xff]
    %v374 = vld [vmem:[%s5] sm:$0x1]
    %v376 = vlaneseq
    %v377 = vshrl.u32 %v376, 7
    %v378 = vsub.s32 0, %v377
    %v379 = vrot.slane %v374, %v378
    %vm381 = vcmask 130048
    %v383 = vsel %vm381, %v81, 0
    %385 = vmatprep.subr.mxu0 0.0
    %386 = vmatpush1.msra.mxu0 %v372
    %387 = vmatprep.subr.mxu0 0.0
    %388 = vmatpush1.msra.mxu0 %v373
    %389 = vmatprep.subr.mxu0 0.0
    %390 = vmatpush1.msra.mxu0 0.0
    %391 = vmatprep.subr.mxu0 0.0
    %392 = vmatpush1.msra.mxu0 0.0
    %393 = vmatprep.subr.mxu0 0.0
    %394 = vmatpush1.msra.mxu0 0.0
    %395 = vmatprep.subr.mxu0 0.0
    %396 = vmatpush1.msra.mxu0 0.0
    %397 = vmatprep.subr.mxu0 0.0
    %398 = vmatpush1.msra.mxu0 0.0
    %399 = vmatprep.subr.mxu0 0.0
    %400 = vmatpush1.msra.mxu0 0.0
    %401 = vmatprep.subr.mxu0 0.0
    %402 = vmatpush1.msra.mxu0 0.0
    %403 = vmatprep.subr.mxu0 0.0
    %404 = vmatpush1.msra.mxu0 0.0
    %405 = vmatprep.subr.mxu0 0.0
    %406 = vmatpush1.msra.mxu0 0.0
    %407 = vmatprep.subr.mxu0 0.0
    %408 = vmatpush1.msra.mxu0 0.0
    %409 = vmatprep.subr.mxu0 0.0
    %410 = vmatpush1.msra.mxu0 0.0
    %411 = vmatprep.subr.mxu0 0.0
    %412 = vmatpush1.msra.mxu0 0.0
    %413 = vmatprep.subr.mxu0 0.0
    %414 = vmatpush1.msra.mxu0 0.0
    %415 = vmatprep.subr.mxu0 0.0
    %416 = vmatpush1.msra.mxu0 0.0
    %417 = vmatprep.subr.mxu0 0.0
    %418 = vmatpush1.msra.mxu0 0.0
    %419 = vmatprep.subr.mxu0 0.0
    %420 = vmatpush1.msra.mxu0 0.0
    %421 = vmatprep.subr.mxu0 0.0
    %422 = vmatpush1.msra.mxu0 0.0
    %423 = vmatprep.subr.mxu0 0.0
    %424 = vmatpush1.msra.mxu0 0.0
    %425 = vmatprep.subr.mxu0 0.0
    %426 = vmatpush1.msra.mxu0 0.0
    %427 = vmatprep.subr.mxu0 0.0
    %428 = vmatpush1.msra.mxu0 0.0
    %429 = vmatprep.subr.mxu0 0.0
    %430 = vmatpush1.msra.mxu0 0.0
    %431 = vmatprep.subr.mxu0 0.0
    %432 = vmatpush1.msra.mxu0 0.0
    %433 = vmatprep.subr.mxu0 0.0
    %434 = vmatpush1.msra.mxu0 0.0
    %435 = vmatprep.subr.mxu0 0.0
    %436 = vmatpush1.msra.mxu0 0.0
    %437 = vmatprep.subr.mxu0 0.0
    %438 = vmatpush1.msra.mxu0 0.0
    %439 = vmatprep.subr.mxu0 0.0
    %440 = vmatpush1.msra.mxu0 0.0
    %441 = vmatprep.subr.mxu0 0.0
    %442 = vmatpush1.msra.mxu0 0.0
    %443 = vmatprep.subr.mxu0 0.0
    %444 = vmatpush1.msra.mxu0 0.0
    %445 = vmatprep.subr.mxu0 0.0
    %446 = vmatpush1.msra.mxu0 0.0
    %447 = vmatprep.subr.mxu0 0.0
    %448 = vmatpush1.msra.mxu0 0.0
    %449 = vmatprep.mubr.f32.mxu0 0.0
    %450 = vmatmul.mubr.f32.gmra.mrb[0].mxu0 %v383
    %v451 = vpop.f32.mrb[0].mxu0
    %v452 = vadd.f32 %v379, %v451
    %v453 = vpop.f32.mrb[0].mxu0
    %454 = vdwg.mxu0
    %v456 = vcombine.high %v452, %v452
    %v458 = vunpack.c.l.s4 1966171168
    %v459 = vunpack.c.0.s8 %v458
    %v460 = vlaneseq
    %v461 = vshrl.u32 %v460, 7
    %v462 = vsub.s32 %v459, %v461
    %v463 = vrot.slane %v452, %v462
    %v465 = vunpack.c.l.s4 1966171168
    %v466 = vunpack.c.0.s8 %v465
    %v467 = vlaneseq
    %v468 = vshrl.u32 %v467, 7
    %v469 = vsub.s32 %v466, %v468
    %v470 = vrot.slane %v456, %v469
    %v471 = vcombine.high %v463, %v463
    %v472 = vcombine.high %v470, %v470
    %v474 = vunpack.c.l.s4 1966171168
    %v475 = vunpack.c.0.s8 %v474
    %v476 = vlaneseq
    %v477 = vshrl.u32 %v476, 7
    %v478 = vsub.s32 %v475, %v477
    %v479 = vrot.slane %v463, %v478
    %v481 = vunpack.c.l.s4 1966171168
    %v482 = vunpack.c.0.s8 %v481
    %v483 = vlaneseq
    %v484 = vshrl.u32 %v483, 7
    %v485 = vsub.s32 %v482, %v484
    %v486 = vrot.slane %v470, %v485
    %v488 = vunpack.c.l.s4 1966171168
    %v489 = vunpack.c.0.s8 %v488
    %v490 = vlaneseq
    %v491 = vshrl.u32 %v490, 7
    %v492 = vsub.s32 %v489, %v491
    %v493 = vrot.slane %v471, %v492
    %v495 = vunpack.c.l.s4 1966171168
    %v496 = vunpack.c.0.s8 %v495
    %v497 = vlaneseq
    %v498 = vshrl.u32 %v497, 7
    %v499 = vsub.s32 %v496, %v498
    %v500 = vrot.slane %v472, %v499
    %v501 = vcombine.high %v479, %v479
    %v502 = vcombine.high %v486, %v486
    %v503 = vcombine.high %v493, %v493
    %v504 = vcombine.high %v500, %v500
    %v505 = vlaneseq
    %v506 = vshrl.u32 %v505, 7
    %v507 = vsub.s32 0, %v506
    %v508 = vrot.slane %v479, %v507
    %v509 = vlaneseq
    %v510 = vshrl.u32 %v509, 7
    %v511 = vsub.s32 0, %v510
    %v512 = vrot.slane %v493, %v511
    %v513 = vlaneseq
    %v514 = vshrl.u32 %v513, 7
    %v515 = vsub.s32 0, %v514
    %v516 = vrot.slane %v501, %v515
    %v517 = vlaneseq
    %v518 = vshrl.u32 %v517, 7
    %v519 = vsub.s32 0, %v518
    %v520 = vrot.slane %v503, %v519
    %v521 = vlaneseq
    %v522 = vshrl.u32 %v521, 7
    %v523 = vsub.s32 0, %v522
    %v524 = vrot.slane %v486, %v523
    %v525 = vlaneseq
    %v526 = vshrl.u32 %v525, 7
    %v527 = vsub.s32 0, %v526
    %v528 = vrot.slane %v500, %v527
    %v529 = vlaneseq
    %v530 = vshrl.u32 %v529, 7
    %v531 = vsub.s32 0, %v530
    %v532 = vrot.slane %v502, %v531
    %v533 = vlaneseq
    %v534 = vshrl.u32 %v533, 7
    %v535 = vsub.s32 0, %v534
    %v536 = vrot.slane %v504, %v535
    %v545 = vadd.f32 %v254, %v508
    %v546 = vadd.f32 %v259, %v508
    %v547 = vadd.f32 %v264, %v508
    %v548 = vadd.f32 %v269, %v512
    %v549 = vadd.f32 %v274, %v512
    %v550 = vadd.f32 %v279, %v512
    %v551 = vadd.f32 %v284, %v516
    %v552 = vadd.f32 %v289, %v516
    %v553 = vadd.f32 %v294, %v516
    %v554 = vadd.f32 %v299, %v520
    %v555 = vadd.f32 %v304, %v520
    %v556 = vadd.f32 %v309, %v520
    %v557 = vadd.f32 %v314, %v524
    %v558 = vadd.f32 %v319, %v524
    %v559 = vadd.f32 %v324, %v524
    %v560 = vadd.f32 %v329, %v528
    %v561 = vadd.f32 %v334, %v528
    %v562 = vadd.f32 %v339, %v528
    %v563 = vadd.f32 %v344, %v532
    %v564 = vadd.f32 %v349, %v532
    %v565 = vadd.f32 %v354, %v532
    %v566 = vadd.f32 %v359, %v536
    %v567 = vadd.f32 %v364, %v536
    %v568 = vadd.f32 %v369, %v536
    %v569 = vtanh.pop %v545
    %v570 = vtanh.pop %v546
    %v571 = vtanh.pop %v547
    %v572 = vtanh.pop %v548
    %v573 = vtanh.pop %v549
    %v574 = vtanh.pop %v550
    %v575 = vtanh.pop %v551
    %v576 = vtanh.pop %v552
    %v577 = vtanh.pop %v553
    %v578 = vtanh.pop %v554
    %v579 = vtanh.pop %v555
    %v580 = vtanh.pop %v556
    %v581 = vtanh.pop %v557
    %v582 = vtanh.pop %v558
    %v583 = vtanh.pop %v559
    %v584 = vtanh.pop %v560
    %v585 = vtanh.pop %v561
    %v586 = vtanh.pop %v562
    %v587 = vtanh.pop %v563
    %v588 = vtanh.pop %v564
    %v589 = vtanh.pop %v565
    %v590 = vtanh.pop %v566
    %v591 = vtanh.pop %v567
    %v592 = vtanh.pop %v568
    %v593 = vld [vmem:[%s6] sm:$0x1]
    %v595 = vlaneseq
    %v596 = vshrl.u32 %v595, 7
    %v597 = vsub.s32 0, %v596
    %v598 = vrot.slane %v593, %v597
    %v600 = vmul.f32 %v569, %v598
    %v601 = vmul.f32 %v570, %v598
    %v602 = vmul.f32 %v571, %v598
    %v603 = vmul.f32 %v572, %v598
    %v604 = vmul.f32 %v573, %v598
    %v605 = vmul.f32 %v574, %v598
    %v606 = vmul.f32 %v575, %v598
    %v607 = vmul.f32 %v576, %v598
    %v608 = vmul.f32 %v577, %v598
    %v609 = vmul.f32 %v578, %v598
    %v610 = vmul.f32 %v579, %v598
    %v611 = vmul.f32 %v580, %v598
    %v612 = vmul.f32 %v581, %v598
    %v613 = vmul.f32 %v582, %v598
    %v614 = vmul.f32 %v583, %v598
    %v615 = vmul.f32 %v584, %v598
    %v616 = vmul.f32 %v585, %v598
    %v617 = vmul.f32 %v586, %v598
    %v618 = vmul.f32 %v587, %v598
    %v619 = vmul.f32 %v588, %v598
    %v620 = vmul.f32 %v589, %v598
    %v621 = vmul.f32 %v590, %v598
    %v622 = vmul.f32 %v591, %v598
    %v623 = vmul.f32 %v592, %v598
    %v624 = vsel %vm381, %v600, 0.0
    %625 = vadd.xlane.f32.xlu0 %v624
    %v626 = vpop.xlane.xlu0 %625
    %v627 = vsel %vm381, %v601, 0.0
    %628 = vadd.xlane.f32.xlu0 %v627
    %v629 = vpop.xlane.xlu0 %628
    %v630 = vsel %vm381, %v602, 0.0
    %631 = vadd.xlane.f32.xlu0 %v630
    %v632 = vpop.xlane.xlu0 %631
    %v633 = vsel %vm381, %v603, 0.0
    %634 = vadd.xlane.f32.xlu0 %v633
    %v635 = vpop.xlane.xlu0 %634
    %v636 = vsel %vm381, %v604, 0.0
    %637 = vadd.xlane.f32.xlu0 %v636
    %v638 = vpop.xlane.xlu0 %637
    %v639 = vsel %vm381, %v605, 0.0
    %640 = vadd.xlane.f32.xlu0 %v639
    %v641 = vpop.xlane.xlu0 %640
    %v642 = vsel %vm381, %v606, 0.0
    %643 = vadd.xlane.f32.xlu0 %v642
    %v644 = vpop.xlane.xlu0 %643
    %v645 = vsel %vm381, %v607, 0.0
    %646 = vadd.xlane.f32.xlu0 %v645
    %v647 = vpop.xlane.xlu0 %646
    %v648 = vsel %vm381, %v608, 0.0
    %649 = vadd.xlane.f32.xlu0 %v648
    %v650 = vpop.xlane.xlu0 %649
    %v651 = vsel %vm381, %v609, 0.0
    %652 = vadd.xlane.f32.xlu0 %v651
    %v653 = vpop.xlane.xlu0 %652
    %v654 = vsel %vm381, %v610, 0.0
    %655 = vadd.xlane.f32.xlu0 %v654
    %v656 = vpop.xlane.xlu0 %655
    %v657 = vsel %vm381, %v611, 0.0
    %658 = vadd.xlane.f32.xlu0 %v657
    %v659 = vpop.xlane.xlu0 %658
    %v660 = vsel %vm381, %v612, 0.0
    %661 = vadd.xlane.f32.xlu0 %v660
    %v662 = vpop.xlane.xlu0 %661
    %v663 = vsel %vm381, %v613, 0.0
    %664 = vadd.xlane.f32.xlu0 %v663
    %v665 = vpop.xlane.xlu0 %664
    %v666 = vsel %vm381, %v614, 0.0
    %667 = vadd.xlane.f32.xlu0 %v666
    %v668 = vpop.xlane.xlu0 %667
    %v669 = vsel %vm381, %v615, 0.0
    %670 = vadd.xlane.f32.xlu0 %v669
    %v671 = vpop.xlane.xlu0 %670
    %v672 = vsel %vm381, %v616, 0.0
    %673 = vadd.xlane.f32.xlu0 %v672
    %v674 = vpop.xlane.xlu0 %673
    %v675 = vsel %vm381, %v617, 0.0
    %676 = vadd.xlane.f32.xlu0 %v675
    %v677 = vpop.xlane.xlu0 %676
    %v678 = vsel %vm381, %v618, 0.0
    %679 = vadd.xlane.f32.xlu0 %v678
    %v680 = vpop.xlane.xlu0 %679
    %v681 = vsel %vm381, %v619, 0.0
    %682 = vadd.xlane.f32.xlu0 %v681
    %v683 = vpop.xlane.xlu0 %682
    %v684 = vsel %vm381, %v620, 0.0
    %685 = vadd.xlane.f32.xlu0 %v684
    %v686 = vpop.xlane.xlu0 %685
    %v687 = vsel %vm381, %v621, 0.0
    %688 = vadd.xlane.f32.xlu0 %v687
    %v689 = vpop.xlane.xlu0 %688
    %v690 = vsel %vm381, %v622, 0.0
    %691 = vadd.xlane.f32.xlu0 %v690
    %v692 = vpop.xlane.xlu0 %691
    %v693 = vsel %vm381, %v623, 0.0
    %694 = vadd.xlane.f32.xlu0 %v693
    %v695 = vpop.xlane.xlu0 %694
    %v696 = vstv %s107
    %v697 = vadd.f32 %v626, %v696
    %v698 = vadd.f32 %v629, %v696
    %v699 = vadd.f32 %v632, %v696
    %v700 = vadd.f32 %v635, %v696
    %v701 = vadd.f32 %v638, %v696
    %v702 = vadd.f32 %v641, %v696
    %v703 = vadd.f32 %v644, %v696
    %v704 = vadd.f32 %v647, %v696
    %v705 = vadd.f32 %v650, %v696
    %v706 = vadd.f32 %v653, %v696
    %v707 = vadd.f32 %v656, %v696
    %v708 = vadd.f32 %v659, %v696
    %v709 = vadd.f32 %v662, %v696
    %v710 = vadd.f32 %v665, %v696
    %v711 = vadd.f32 %v668, %v696
    %v712 = vadd.f32 %v671, %v696
    %v713 = vadd.f32 %v674, %v696
    %v714 = vadd.f32 %v677, %v696
    %v715 = vadd.f32 %v680, %v696
    %v716 = vadd.f32 %v683, %v696
    %v717 = vadd.f32 %v686, %v696
    %v718 = vadd.f32 %v689, %v696
    %v719 = vadd.f32 %v692, %v696
    %v720 = vadd.f32 %v695, %v696
    %v721 = vlaneseq
    %v722 = vand.u32 %v721, 127
    %v723 = vlaneseq
    %v724 = vshrl.u32 %v723, 7
    %v725 = vsub.s32 0, %v724
    %v726 = vrot.slane %v106, %v725
    %728 = vbcast.lane.b32.xlu0 %v726, 256
    %v729 = vpop.permute.xlu0 %728
    %v730 = vlaneseq
    %v731 = vshrl.u32 %v730, 7
    %v732 = vsub.s32 1, %v731
    %v733 = vrot.slane %v106, %v732
    %735 = vbcast.lane.b32.xlu0 %v733, 256
    %v736 = vpop.permute.xlu0 %735
    %v737 = vlaneseq
    %v738 = vshrl.u32 %v737, 7
    %v739 = vsub.s32 2, %v738
    %v740 = vrot.slane %v106, %v739
    %742 = vbcast.lane.b32.xlu0 %v740, 256
    %v743 = vpop.permute.xlu0 %742
    %v744 = vlaneseq
    %v745 = vshrl.u32 %v744, 7
    %v746 = vsub.s32 3, %v745
    %v747 = vrot.slane %v106, %v746
    %749 = vbcast.lane.b32.xlu0 %v747, 256
    %v750 = vpop.permute.xlu0 %749
    %v751 = vlaneseq
    %v752 = vshrl.u32 %v751, 7
    %v753 = vsub.s32 4, %v752
    %v754 = vrot.slane %v106, %v753
    %756 = vbcast.lane.b32.xlu0 %v754, 256
    %v757 = vpop.permute.xlu0 %756
    %v758 = vlaneseq
    %v759 = vshrl.u32 %v758, 7
    %v760 = vsub.s32 5, %v759
    %v761 = vrot.slane %v106, %v760
    %763 = vbcast.lane.b32.xlu0 %v761, 256
    %v764 = vpop.permute.xlu0 %763
    %v765 = vlaneseq
    %v766 = vshrl.u32 %v765, 7
    %v767 = vsub.s32 6, %v766
    %v768 = vrot.slane %v106, %v767
    %770 = vbcast.lane.b32.xlu0 %v768, 256
    %v771 = vpop.permute.xlu0 %770
    %v772 = vlaneseq
    %v773 = vshrl.u32 %v772, 7
    %v774 = vsub.s32 7, %v773
    %v775 = vrot.slane %v106, %v774
    %777 = vbcast.lane.b32.xlu0 %v775, 256
    %v778 = vpop.permute.xlu0 %777
    %vm779 = vcmp.lt.s32.totalorder %v722, %v729
    %vm780 = vcmp.lt.s32.totalorder %v722, %v736
    %vm781 = vcmp.lt.s32.totalorder %v722, %v743
    %vm782 = vcmp.lt.s32.totalorder %v722, %v750
    %vm783 = vcmp.lt.s32.totalorder %v722, %v757
    %vm784 = vcmp.lt.s32.totalorder %v722, %v764
    %vm785 = vcmp.lt.s32.totalorder %v722, %v771
    %vm786 = vcmp.lt.s32.totalorder %v722, %v778
    %v787 = vsel %vm779, 1, 0
    %v788 = vsel %vm780, 1, 0
    %v789 = vsel %vm781, 1, 0
    %v790 = vsel %vm782, 1, 0
    %v791 = vsel %vm783, 1, 0
    %v792 = vsel %vm784, 1, 0
    %v793 = vsel %vm785, 1, 0
    %v794 = vsel %vm786, 1, 0
    %v795 = vcvt.s32.f32 %v787
    %v796 = vcvt.s32.f32 %v788
    %v797 = vcvt.s32.f32 %v789
    %v798 = vcvt.s32.f32 %v790
    %v799 = vcvt.s32.f32 %v791
    %v800 = vcvt.s32.f32 %v792
    %v801 = vcvt.s32.f32 %v793
    %v802 = vcvt.s32.f32 %v794
    %vm803 = vcmp.gt.f32.partialorder %v795, 0.0
    %vm804 = vcmp.gt.f32.partialorder %v796, 0.0
    %vm805 = vcmp.gt.f32.partialorder %v797, 0.0
    %vm806 = vcmp.gt.f32.partialorder %v798, 0.0
    %vm807 = vcmp.gt.f32.partialorder %v799, 0.0
    %vm808 = vcmp.gt.f32.partialorder %v800, 0.0
    %vm809 = vcmp.gt.f32.partialorder %v801, 0.0
    %vm810 = vcmp.gt.f32.partialorder %v802, 0.0
    %v835 = vlaneseq
    %v836 = vshrl.u32 %v835, 7
    %v837 = vsub.s32 %v722, %v836
    %v838 = vrot.slane %v697, %v837
    %v839 = vlaneseq
    %v840 = vshrl.u32 %v839, 7
    %v841 = vsub.s32 %v722, %v840
    %v842 = vrot.slane %v698, %v841
    %v843 = vlaneseq
    %v844 = vshrl.u32 %v843, 7
    %v845 = vsub.s32 %v722, %v844
    %v846 = vrot.slane %v699, %v845
    %v847 = vlaneseq
    %v848 = vshrl.u32 %v847, 7
    %v849 = vsub.s32 %v722, %v848
    %v850 = vrot.slane %v700, %v849
    %v851 = vlaneseq
    %v852 = vshrl.u32 %v851, 7
    %v853 = vsub.s32 %v722, %v852
    %v854 = vrot.slane %v701, %v853
    %v855 = vlaneseq
    %v856 = vshrl.u32 %v855, 7
    %v857 = vsub.s32 %v722, %v856
    %v858 = vrot.slane %v702, %v857
    %v859 = vlaneseq
    %v860 = vshrl.u32 %v859, 7
    %v861 = vsub.s32 %v722, %v860
    %v862 = vrot.slane %v703, %v861
    %v863 = vlaneseq
    %v864 = vshrl.u32 %v863, 7
    %v865 = vsub.s32 %v722, %v864
    %v866 = vrot.slane %v704, %v865
    %v867 = vlaneseq
    %v868 = vshrl.u32 %v867, 7
    %v869 = vsub.s32 %v722, %v868
    %v870 = vrot.slane %v705, %v869
    %v871 = vlaneseq
    %v872 = vshrl.u32 %v871, 7
    %v873 = vsub.s32 %v722, %v872
    %v874 = vrot.slane %v706, %v873
    %v875 = vlaneseq
    %v876 = vshrl.u32 %v875, 7
    %v877 = vsub.s32 %v722, %v876
    %v878 = vrot.slane %v707, %v877
    %v879 = vlaneseq
    %v880 = vshrl.u32 %v879, 7
    %v881 = vsub.s32 %v722, %v880
    %v882 = vrot.slane %v708, %v881
    %v883 = vlaneseq
    %v884 = vshrl.u32 %v883, 7
    %v885 = vsub.s32 %v722, %v884
    %v886 = vrot.slane %v709, %v885
    %v887 = vlaneseq
    %v888 = vshrl.u32 %v887, 7
    %v889 = vsub.s32 %v722, %v888
    %v890 = vrot.slane %v710, %v889
    %v891 = vlaneseq
    %v892 = vshrl.u32 %v891, 7
    %v893 = vsub.s32 %v722, %v892
    %v894 = vrot.slane %v711, %v893
    %v895 = vlaneseq
    %v896 = vshrl.u32 %v895, 7
    %v897 = vsub.s32 %v722, %v896
    %v898 = vrot.slane %v712, %v897
    %v899 = vlaneseq
    %v900 = vshrl.u32 %v899, 7
    %v901 = vsub.s32 %v722, %v900
    %v902 = vrot.slane %v713, %v901
    %v903 = vlaneseq
    %v904 = vshrl.u32 %v903, 7
    %v905 = vsub.s32 %v722, %v904
    %v906 = vrot.slane %v714, %v905
    %v907 = vlaneseq
    %v908 = vshrl.u32 %v907, 7
    %v909 = vsub.s32 %v722, %v908
    %v910 = vrot.slane %v715, %v909
    %v911 = vlaneseq
    %v912 = vshrl.u32 %v911, 7
    %v913 = vsub.s32 %v722, %v912
    %v914 = vrot.slane %v716, %v913
    %v915 = vlaneseq
    %v916 = vshrl.u32 %v915, 7
    %v917 = vsub.s32 %v722, %v916
    %v918 = vrot.slane %v717, %v917
    %v919 = vlaneseq
    %v920 = vshrl.u32 %v919, 7
    %v921 = vsub.s32 %v722, %v920
    %v922 = vrot.slane %v718, %v921
    %v923 = vlaneseq
    %v924 = vshrl.u32 %v923, 7
    %v925 = vsub.s32 %v722, %v924
    %v926 = vrot.slane %v719, %v925
    %v927 = vlaneseq
    %v928 = vshrl.u32 %v927, 7
    %v929 = vsub.s32 %v722, %v928
    %v930 = vrot.slane %v720, %v929
    %vm931 = vcmask 1041409
    %v932 = vsel %vm931, %v842, %v838
    %vm933 = vcmask 1042434
    %v934 = vsel %vm933, %v846, %v932
    %v935 = vsel %vm931, %v854, %v850
    %v936 = vsel %vm933, %v858, %v935
    %v937 = vsel %vm931, %v866, %v862
    %v938 = vsel %vm933, %v870, %v937
    %v939 = vsel %vm931, %v878, %v874
    %v940 = vsel %vm933, %v882, %v939
    %v941 = vsel %vm931, %v890, %v886
    %v942 = vsel %vm933, %v894, %v941
    %v943 = vsel %vm931, %v902, %v898
    %v944 = vsel %vm933, %v906, %v943
    %v945 = vsel %vm931, %v914, %v910
    %v946 = vsel %vm933, %v918, %v945
    %v947 = vsel %vm931, %v926, %v922
    %v948 = vsel %vm933, %v930, %v947
    %v957 = vsel %vm803, %v934, -1e+30
    %v958 = vsel %vm804, %v936, -1e+30
    %v959 = vsel %vm805, %v938, -1e+30
    %v960 = vsel %vm806, %v940, -1e+30
    %v961 = vsel %vm807, %v942, -1e+30
    %v962 = vsel %vm808, %v944, -1e+30
    %v963 = vsel %vm809, %v946, -1e+30
    %v964 = vsel %vm810, %v948, -1e+30
    %vm965 = vcmask 59392
    %v966 = vsel %vm965, %v957, -inf
    %967 = vmax.xlane.f32.xlu0 %v966
    %v968 = vpop.xlane.xlu0 %967
    %v969 = vsel %vm965, %v958, -inf
    %970 = vmax.xlane.f32.xlu0 %v969
    %v971 = vpop.xlane.xlu0 %970
    %v972 = vsel %vm965, %v959, -inf
    %973 = vmax.xlane.f32.xlu0 %v972
    %v974 = vpop.xlane.xlu0 %973
    %v975 = vsel %vm965, %v960, -inf
    %976 = vmax.xlane.f32.xlu0 %v975
    %v977 = vpop.xlane.xlu0 %976
    %v978 = vsel %vm965, %v961, -inf
    %979 = vmax.xlane.f32.xlu0 %v978
    %v980 = vpop.xlane.xlu0 %979
    %v981 = vsel %vm965, %v962, -inf
    %982 = vmax.xlane.f32.xlu0 %v981
    %v983 = vpop.xlane.xlu0 %982
    %v984 = vsel %vm965, %v963, -inf
    %985 = vmax.xlane.f32.xlu0 %v984
    %v986 = vpop.xlane.xlu0 %985
    %v987 = vsel %vm965, %v964, -inf
    %988 = vmax.xlane.f32.xlu0 %v987
    %v989 = vpop.xlane.xlu0 %988
    %v990 = vsub.f32 %v957, %v968
    %v991 = vsub.f32 %v958, %v971
    %v992 = vsub.f32 %v959, %v974
    %v993 = vsub.f32 %v960, %v977
    %v994 = vsub.f32 %v961, %v980
    %v995 = vsub.f32 %v962, %v983
    %v996 = vsub.f32 %v963, %v986
    %v997 = vsub.f32 %v964, %v989
    %v998 = vmul.f32 %v990, 1.442695
    %v999 = vpow.pop %v998
    %v1000 = vmul.f32 %v991, 1.442695
    %v1001 = vpow.pop %v1000
    %v1002 = vmul.f32 %v992, 1.442695
    %v1003 = vpow.pop %v1002
    %v1004 = vmul.f32 %v993, 1.442695
    %v1005 = vpow.pop %v1004
    %v1006 = vmul.f32 %v994, 1.442695
    %v1007 = vpow.pop %v1006
    %v1008 = vmul.f32 %v995, 1.442695
    %v1009 = vpow.pop %v1008
    %v1010 = vmul.f32 %v996, 1.442695
    %v1011 = vpow.pop %v1010
    %v1012 = vmul.f32 %v997, 1.442695
    %v1013 = vpow.pop %v1012
    %v1014 = vmul.f32 %v999, %v795
    %v1015 = vmul.f32 %v1001, %v796
    %v1016 = vmul.f32 %v1003, %v797
    %v1017 = vmul.f32 %v1005, %v798
    %v1018 = vmul.f32 %v1007, %v799
    %v1019 = vmul.f32 %v1009, %v800
    %v1020 = vmul.f32 %v1011, %v801
    %v1021 = vmul.f32 %v1013, %v802
    %v1022 = vsel %vm965, %v1014, 0.0
    %1023 = vadd.xlane.f32.xlu0 %v1022
    %v1024 = vpop.xlane.xlu0 %1023
    %v1025 = vsel %vm965, %v1015, 0.0
    %1026 = vadd.xlane.f32.xlu0 %v1025
    %v1027 = vpop.xlane.xlu0 %1026
    %v1028 = vsel %vm965, %v1016, 0.0
    %1029 = vadd.xlane.f32.xlu0 %v1028
    %v1030 = vpop.xlane.xlu0 %1029
    %v1031 = vsel %vm965, %v1017, 0.0
    %1032 = vadd.xlane.f32.xlu0 %v1031
    %v1033 = vpop.xlane.xlu0 %1032
    %v1034 = vsel %vm965, %v1018, 0.0
    %1035 = vadd.xlane.f32.xlu0 %v1034
    %v1036 = vpop.xlane.xlu0 %1035
    %v1037 = vsel %vm965, %v1019, 0.0
    %1038 = vadd.xlane.f32.xlu0 %v1037
    %v1039 = vpop.xlane.xlu0 %1038
    %v1040 = vsel %vm965, %v1020, 0.0
    %1041 = vadd.xlane.f32.xlu0 %v1040
    %v1042 = vpop.xlane.xlu0 %1041
    %v1043 = vsel %vm965, %v1021, 0.0
    %1044 = vadd.xlane.f32.xlu0 %v1043
    %v1045 = vpop.xlane.xlu0 %1044
    %v1046 = vmax.f32 %v1024, 1e-30
    %v1047 = vmax.f32 %v1027, 1e-30
    %v1048 = vmax.f32 %v1030, 1e-30
    %v1049 = vmax.f32 %v1033, 1e-30
    %v1050 = vmax.f32 %v1036, 1e-30
    %v1051 = vmax.f32 %v1039, 1e-30
    %v1052 = vmax.f32 %v1042, 1e-30
    %v1053 = vmax.f32 %v1045, 1e-30
    %v1054 = vrcp.pop %v1046
    %v1055 = vmul.f32 %v1014, %v1054
    %v1056 = vrcp.pop %v1047
    %v1057 = vmul.f32 %v1015, %v1056
    %v1058 = vrcp.pop %v1048
    %v1059 = vmul.f32 %v1016, %v1058
    %v1060 = vrcp.pop %v1049
    %v1061 = vmul.f32 %v1017, %v1060
    %v1062 = vrcp.pop %v1050
    %v1063 = vmul.f32 %v1018, %v1062
    %v1064 = vrcp.pop %v1051
    %v1065 = vmul.f32 %v1019, %v1064
    %v1066 = vrcp.pop %v1052
    %v1067 = vmul.f32 %v1020, %v1066
    %v1068 = vrcp.pop %v1053
    %v1069 = vmul.f32 %v1021, %v1068
    %v1070 = vlaneseq
    %v1071 = vshrl.u32 %v1070, 7
    %v1072 = vsub.s32 0, %v1071
    %v1073 = vrot.slane %v1055, %v1072
    %1075 = vbcast.lane.b32.xlu0 %v1073, 256
    %v1076 = vpop.permute.xlu0 %1075
    %v1077 = vlaneseq
    %v1078 = vshrl.u32 %v1077, 7
    %v1079 = vsub.s32 1, %v1078
    %v1080 = vrot.slane %v1055, %v1079
    %1082 = vbcast.lane.b32.xlu0 %v1080, 256
    %v1083 = vpop.permute.xlu0 %1082
    %v1084 = vlaneseq
    %v1085 = vshrl.u32 %v1084, 7
    %v1086 = vsub.s32 2, %v1085
    %v1087 = vrot.slane %v1055, %v1086
    %1089 = vbcast.lane.b32.xlu0 %v1087, 256
    %v1090 = vpop.permute.xlu0 %1089
    %v1091 = vlaneseq
    %v1092 = vshrl.u32 %v1091, 7
    %v1093 = vsub.s32 0, %v1092
    %v1094 = vrot.slane %v1057, %v1093
    %1096 = vbcast.lane.b32.xlu0 %v1094, 256
    %v1097 = vpop.permute.xlu0 %1096
    %v1098 = vlaneseq
    %v1099 = vshrl.u32 %v1098, 7
    %v1100 = vsub.s32 1, %v1099
    %v1101 = vrot.slane %v1057, %v1100
    %1103 = vbcast.lane.b32.xlu0 %v1101, 256
    %v1104 = vpop.permute.xlu0 %1103
    %v1105 = vlaneseq
    %v1106 = vshrl.u32 %v1105, 7
    %v1107 = vsub.s32 2, %v1106
    %v1108 = vrot.slane %v1057, %v1107
    %1110 = vbcast.lane.b32.xlu0 %v1108, 256
    %v1111 = vpop.permute.xlu0 %1110
    %v1112 = vlaneseq
    %v1113 = vshrl.u32 %v1112, 7
    %v1114 = vsub.s32 0, %v1113
    %v1115 = vrot.slane %v1059, %v1114
    %1117 = vbcast.lane.b32.xlu0 %v1115, 256
    %v1118 = vpop.permute.xlu0 %1117
    %v1119 = vlaneseq
    %v1120 = vshrl.u32 %v1119, 7
    %v1121 = vsub.s32 1, %v1120
    %v1122 = vrot.slane %v1059, %v1121
    %1124 = vbcast.lane.b32.xlu0 %v1122, 256
    %v1125 = vpop.permute.xlu0 %1124
    %v1126 = vlaneseq
    %v1127 = vshrl.u32 %v1126, 7
    %v1128 = vsub.s32 2, %v1127
    %v1129 = vrot.slane %v1059, %v1128
    %1131 = vbcast.lane.b32.xlu0 %v1129, 256
    %v1132 = vpop.permute.xlu0 %1131
    %v1133 = vlaneseq
    %v1134 = vshrl.u32 %v1133, 7
    %v1135 = vsub.s32 0, %v1134
    %v1136 = vrot.slane %v1061, %v1135
    %1138 = vbcast.lane.b32.xlu0 %v1136, 256
    %v1139 = vpop.permute.xlu0 %1138
    %v1140 = vlaneseq
    %v1141 = vshrl.u32 %v1140, 7
    %v1142 = vsub.s32 1, %v1141
    %v1143 = vrot.slane %v1061, %v1142
    %1145 = vbcast.lane.b32.xlu0 %v1143, 256
    %v1146 = vpop.permute.xlu0 %1145
    %v1147 = vlaneseq
    %v1148 = vshrl.u32 %v1147, 7
    %v1149 = vsub.s32 2, %v1148
    %v1150 = vrot.slane %v1061, %v1149
    %1152 = vbcast.lane.b32.xlu0 %v1150, 256
    %v1153 = vpop.permute.xlu0 %1152
    %v1154 = vlaneseq
    %v1155 = vshrl.u32 %v1154, 7
    %v1156 = vsub.s32 0, %v1155
    %v1157 = vrot.slane %v1063, %v1156
    %1159 = vbcast.lane.b32.xlu0 %v1157, 256
    %v1160 = vpop.permute.xlu0 %1159
    %v1161 = vlaneseq
    %v1162 = vshrl.u32 %v1161, 7
    %v1163 = vsub.s32 1, %v1162
    %v1164 = vrot.slane %v1063, %v1163
    %1166 = vbcast.lane.b32.xlu0 %v1164, 256
    %v1167 = vpop.permute.xlu0 %1166
    %v1168 = vlaneseq
    %v1169 = vshrl.u32 %v1168, 7
    %v1170 = vsub.s32 2, %v1169
    %v1171 = vrot.slane %v1063, %v1170
    %1173 = vbcast.lane.b32.xlu0 %v1171, 256
    %v1174 = vpop.permute.xlu0 %1173
    %v1175 = vlaneseq
    %v1176 = vshrl.u32 %v1175, 7
    %v1177 = vsub.s32 0, %v1176
    %v1178 = vrot.slane %v1065, %v1177
    %1180 = vbcast.lane.b32.xlu0 %v1178, 256
    %v1181 = vpop.permute.xlu0 %1180
    %v1182 = vlaneseq
    %v1183 = vshrl.u32 %v1182, 7
    %v1184 = vsub.s32 1, %v1183
    %v1185 = vrot.slane %v1065, %v1184
    %1187 = vbcast.lane.b32.xlu0 %v1185, 256
    %v1188 = vpop.permute.xlu0 %1187
    %v1189 = vlaneseq
    %v1190 = vshrl.u32 %v1189, 7
    %v1191 = vsub.s32 2, %v1190
    %v1192 = vrot.slane %v1065, %v1191
    %1194 = vbcast.lane.b32.xlu0 %v1192, 256
    %v1195 = vpop.permute.xlu0 %1194
    %v1196 = vlaneseq
    %v1197 = vshrl.u32 %v1196, 7
    %v1198 = vsub.s32 0, %v1197
    %v1199 = vrot.slane %v1067, %v1198
    %1201 = vbcast.lane.b32.xlu0 %v1199, 256
    %v1202 = vpop.permute.xlu0 %1201
    %v1203 = vlaneseq
    %v1204 = vshrl.u32 %v1203, 7
    %v1205 = vsub.s32 1, %v1204
    %v1206 = vrot.slane %v1067, %v1205
    %1208 = vbcast.lane.b32.xlu0 %v1206, 256
    %v1209 = vpop.permute.xlu0 %1208
    %v1210 = vlaneseq
    %v1211 = vshrl.u32 %v1210, 7
    %v1212 = vsub.s32 2, %v1211
    %v1213 = vrot.slane %v1067, %v1212
    %1215 = vbcast.lane.b32.xlu0 %v1213, 256
    %v1216 = vpop.permute.xlu0 %1215
    %v1217 = vlaneseq
    %v1218 = vshrl.u32 %v1217, 7
    %v1219 = vsub.s32 0, %v1218
    %v1220 = vrot.slane %v1069, %v1219
    %1222 = vbcast.lane.b32.xlu0 %v1220, 256
    %v1223 = vpop.permute.xlu0 %1222
    %v1224 = vlaneseq
    %v1225 = vshrl.u32 %v1224, 7
    %v1226 = vsub.s32 1, %v1225
    %v1227 = vrot.slane %v1069, %v1226
    %1229 = vbcast.lane.b32.xlu0 %v1227, 256
    %v1230 = vpop.permute.xlu0 %1229
    %v1231 = vlaneseq
    %v1232 = vshrl.u32 %v1231, 7
    %v1233 = vsub.s32 2, %v1232
    %v1234 = vrot.slane %v1069, %v1233
    %1236 = vbcast.lane.b32.xlu0 %v1234, 256
    %v1237 = vpop.permute.xlu0 %1236
    %v1238 = vmul.f32 %v1076, %v82
    %v1239 = vmul.f32 %v1083, %v83
    %v1240 = vmul.f32 %v1090, %v84
    %v1241 = vmul.f32 %v1097, %v85
    %v1242 = vmul.f32 %v1104, %v86
    %v1243 = vmul.f32 %v1111, %v87
    %v1244 = vmul.f32 %v1118, %v88
    %v1245 = vmul.f32 %v1125, %v89
    %v1246 = vmul.f32 %v1132, %v90
    %v1247 = vmul.f32 %v1139, %v91
    %v1248 = vmul.f32 %v1146, %v92
    %v1249 = vmul.f32 %v1153, %v93
    %v1250 = vmul.f32 %v1160, %v94
    %v1251 = vmul.f32 %v1167, %v95
    %v1252 = vmul.f32 %v1174, %v96
    %v1253 = vmul.f32 %v1181, %v97
    %v1254 = vmul.f32 %v1188, %v98
    %v1255 = vmul.f32 %v1195, %v99
    %v1256 = vmul.f32 %v1202, %v100
    %v1257 = vmul.f32 %v1209, %v101
    %v1258 = vmul.f32 %v1216, %v102
    %v1259 = vmul.f32 %v1223, %v103
    %v1260 = vmul.f32 %v1230, %v104
    %v1261 = vmul.f32 %v1237, %v105
    %v1262 = vsel %vm114, %v1238, 0.0
    %v1263 = vrot.slane %v1262, 4
    %v1264 = vadd.f32 %v1262, %v1263
    %v1265 = vrot.slane %v1264, 2
    %v1266 = vadd.f32 %v1264, %v1265
    %v1267 = vrot.slane %v1266, 1
    %v1268 = vadd.f32 %v1266, %v1267
    %v1269 = vsel %vm114, %v1239, 0.0
    %v1270 = vrot.slane %v1269, 4
    %v1271 = vadd.f32 %v1269, %v1270
    %v1272 = vrot.slane %v1271, 2
    %v1273 = vadd.f32 %v1271, %v1272
    %v1274 = vrot.slane %v1273, 1
    %v1275 = vadd.f32 %v1273, %v1274
    %v1276 = vsel %vm114, %v1240, 0.0
    %v1277 = vrot.slane %v1276, 4
    %v1278 = vadd.f32 %v1276, %v1277
    %v1279 = vrot.slane %v1278, 2
    %v1280 = vadd.f32 %v1278, %v1279
    %v1281 = vrot.slane %v1280, 1
    %v1282 = vadd.f32 %v1280, %v1281
    %v1283 = vsel %vm114, %v1241, 0.0
    %v1284 = vrot.slane %v1283, 4
    %v1285 = vadd.f32 %v1283, %v1284
    %v1286 = vrot.slane %v1285, 2
    %v1287 = vadd.f32 %v1285, %v1286
    %v1288 = vrot.slane %v1287, 1
    %v1289 = vadd.f32 %v1287, %v1288
    %v1290 = vsel %vm114, %v1242, 0.0
    %v1291 = vrot.slane %v1290, 4
    %v1292 = vadd.f32 %v1290, %v1291
    %v1293 = vrot.slane %v1292, 2
    %v1294 = vadd.f32 %v1292, %v1293
    %v1295 = vrot.slane %v1294, 1
    %v1296 = vadd.f32 %v1294, %v1295
    %v1297 = vsel %vm114, %v1243, 0.0
    %v1298 = vrot.slane %v1297, 4
    %v1299 = vadd.f32 %v1297, %v1298
    %v1300 = vrot.slane %v1299, 2
    %v1301 = vadd.f32 %v1299, %v1300
    %v1302 = vrot.slane %v1301, 1
    %v1303 = vadd.f32 %v1301, %v1302
    %v1304 = vsel %vm114, %v1244, 0.0
    %v1305 = vrot.slane %v1304, 4
    %v1306 = vadd.f32 %v1304, %v1305
    %v1307 = vrot.slane %v1306, 2
    %v1308 = vadd.f32 %v1306, %v1307
    %v1309 = vrot.slane %v1308, 1
    %v1310 = vadd.f32 %v1308, %v1309
    %v1311 = vsel %vm114, %v1245, 0.0
    %v1312 = vrot.slane %v1311, 4
    %v1313 = vadd.f32 %v1311, %v1312
    %v1314 = vrot.slane %v1313, 2
    %v1315 = vadd.f32 %v1313, %v1314
    %v1316 = vrot.slane %v1315, 1
    %v1317 = vadd.f32 %v1315, %v1316
    %v1318 = vsel %vm114, %v1246, 0.0
    %v1319 = vrot.slane %v1318, 4
    %v1320 = vadd.f32 %v1318, %v1319
    %v1321 = vrot.slane %v1320, 2
    %v1322 = vadd.f32 %v1320, %v1321
    %v1323 = vrot.slane %v1322, 1
    %v1324 = vadd.f32 %v1322, %v1323
    %v1325 = vsel %vm114, %v1247, 0.0
    %v1326 = vrot.slane %v1325, 4
    %v1327 = vadd.f32 %v1325, %v1326
    %v1328 = vrot.slane %v1327, 2
    %v1329 = vadd.f32 %v1327, %v1328
    %v1330 = vrot.slane %v1329, 1
    %v1331 = vadd.f32 %v1329, %v1330
    %v1332 = vsel %vm114, %v1248, 0.0
    %v1333 = vrot.slane %v1332, 4
    %v1334 = vadd.f32 %v1332, %v1333
    %v1335 = vrot.slane %v1334, 2
    %v1336 = vadd.f32 %v1334, %v1335
    %v1337 = vrot.slane %v1336, 1
    %v1338 = vadd.f32 %v1336, %v1337
    %v1339 = vsel %vm114, %v1249, 0.0
    %v1340 = vrot.slane %v1339, 4
    %v1341 = vadd.f32 %v1339, %v1340
    %v1342 = vrot.slane %v1341, 2
    %v1343 = vadd.f32 %v1341, %v1342
    %v1344 = vrot.slane %v1343, 1
    %v1345 = vadd.f32 %v1343, %v1344
    %v1346 = vsel %vm114, %v1250, 0.0
    %v1347 = vrot.slane %v1346, 4
    %v1348 = vadd.f32 %v1346, %v1347
    %v1349 = vrot.slane %v1348, 2
    %v1350 = vadd.f32 %v1348, %v1349
    %v1351 = vrot.slane %v1350, 1
    %v1352 = vadd.f32 %v1350, %v1351
    %v1353 = vsel %vm114, %v1251, 0.0
    %v1354 = vrot.slane %v1353, 4
    %v1355 = vadd.f32 %v1353, %v1354
    %v1356 = vrot.slane %v1355, 2
    %v1357 = vadd.f32 %v1355, %v1356
    %v1358 = vrot.slane %v1357, 1
    %v1359 = vadd.f32 %v1357, %v1358
    %v1360 = vsel %vm114, %v1252, 0.0
    %v1361 = vrot.slane %v1360, 4
    %v1362 = vadd.f32 %v1360, %v1361
    %v1363 = vrot.slane %v1362, 2
    %v1364 = vadd.f32 %v1362, %v1363
    %v1365 = vrot.slane %v1364, 1
    %v1366 = vadd.f32 %v1364, %v1365
    %v1367 = vsel %vm114, %v1253, 0.0
    %v1368 = vrot.slane %v1367, 4
    %v1369 = vadd.f32 %v1367, %v1368
    %v1370 = vrot.slane %v1369, 2
    %v1371 = vadd.f32 %v1369, %v1370
    %v1372 = vrot.slane %v1371, 1
    %v1373 = vadd.f32 %v1371, %v1372
    %v1374 = vsel %vm114, %v1254, 0.0
    %v1375 = vrot.slane %v1374, 4
    %v1376 = vadd.f32 %v1374, %v1375
    %v1377 = vrot.slane %v1376, 2
    %v1378 = vadd.f32 %v1376, %v1377
    %v1379 = vrot.slane %v1378, 1
    %v1380 = vadd.f32 %v1378, %v1379
    %v1381 = vsel %vm114, %v1255, 0.0
    %v1382 = vrot.slane %v1381, 4
    %v1383 = vadd.f32 %v1381, %v1382
    %v1384 = vrot.slane %v1383, 2
    %v1385 = vadd.f32 %v1383, %v1384
    %v1386 = vrot.slane %v1385, 1
    %v1387 = vadd.f32 %v1385, %v1386
    %v1388 = vsel %vm114, %v1256, 0.0
    %v1389 = vrot.slane %v1388, 4
    %v1390 = vadd.f32 %v1388, %v1389
    %v1391 = vrot.slane %v1390, 2
    %v1392 = vadd.f32 %v1390, %v1391
    %v1393 = vrot.slane %v1392, 1
    %v1394 = vadd.f32 %v1392, %v1393
    %v1395 = vsel %vm114, %v1257, 0.0
    %v1396 = vrot.slane %v1395, 4
    %v1397 = vadd.f32 %v1395, %v1396
    %v1398 = vrot.slane %v1397, 2
    %v1399 = vadd.f32 %v1397, %v1398
    %v1400 = vrot.slane %v1399, 1
    %v1401 = vadd.f32 %v1399, %v1400
    %v1402 = vsel %vm114, %v1258, 0.0
    %v1403 = vrot.slane %v1402, 4
    %v1404 = vadd.f32 %v1402, %v1403
    %v1405 = vrot.slane %v1404, 2
    %v1406 = vadd.f32 %v1404, %v1405
    %v1407 = vrot.slane %v1406, 1
    %v1408 = vadd.f32 %v1406, %v1407
    %v1409 = vsel %vm114, %v1259, 0.0
    %v1410 = vrot.slane %v1409, 4
    %v1411 = vadd.f32 %v1409, %v1410
    %v1412 = vrot.slane %v1411, 2
    %v1413 = vadd.f32 %v1411, %v1412
    %v1414 = vrot.slane %v1413, 1
    %v1415 = vadd.f32 %v1413, %v1414
    %v1416 = vsel %vm114, %v1260, 0.0
    %v1417 = vrot.slane %v1416, 4
    %v1418 = vadd.f32 %v1416, %v1417
    %v1419 = vrot.slane %v1418, 2
    %v1420 = vadd.f32 %v1418, %v1419
    %v1421 = vrot.slane %v1420, 1
    %v1422 = vadd.f32 %v1420, %v1421
    %v1423 = vsel %vm114, %v1261, 0.0
    %v1424 = vrot.slane %v1423, 4
    %v1425 = vadd.f32 %v1423, %v1424
    %v1426 = vrot.slane %v1425, 2
    %v1427 = vadd.f32 %v1425, %v1426
    %v1428 = vrot.slane %v1427, 1
    %v1429 = vadd.f32 %v1427, %v1428
    %v1430 = vld [vmem:[%s7] sm:$0xff]
    %v1431 = vld [vmem:[%s7 + $0x8] sm:$0xff]
    %v1432 = vld [vmem:[%s7 + $0x10] sm:$0xff]
    %v1433 = vld [vmem:[%s7 + $0x18] sm:$0xff]
    %v1458 = vsel %vm931, %v1275, %v1268
    %v1459 = vsel %vm933, %v1282, %v1458
    %vm1460 = vcmask 1043459
    %v1461 = vsel %vm1460, %v1289, %v1459
    %vm1462 = vcmask 1044484
    %v1463 = vsel %vm1462, %v1296, %v1461
    %vm1464 = vcmask 1045509
    %v1465 = vsel %vm1464, %v1303, %v1463
    %vm1466 = vcmask 1046534
    %v1467 = vsel %vm1466, %v1310, %v1465
    %vm1468 = vcmask 1047559
    %v1469 = vsel %vm1468, %v1317, %v1467
    %v1470 = vsel %vm931, %v1331, %v1324
    %v1471 = vsel %vm933, %v1338, %v1470
    %v1472 = vsel %vm1460, %v1345, %v1471
    %v1473 = vsel %vm1462, %v1352, %v1472
    %v1474 = vsel %vm1464, %v1359, %v1473
    %v1475 = vsel %vm1466, %v1366, %v1474
    %v1476 = vsel %vm1468, %v1373, %v1475
    %v1477 = vsel %vm931, %v1387, %v1380
    %v1478 = vsel %vm933, %v1394, %v1477
    %v1479 = vsel %vm1460, %v1401, %v1478
    %v1480 = vsel %vm1462, %v1408, %v1479
    %v1481 = vsel %vm1464, %v1415, %v1480
    %v1482 = vsel %vm1466, %v1422, %v1481
    %v1483 = vsel %vm1468, %v1429, %v1482
    %v1484 = vsel %vm114, %v1469, 0
    %v1486 = vsel %vm114, %v1476, 0
    %v1488 = vsel %vm114, %v1483, 0
    %1490 = vmatprep.subr.mxu0 0.0
    %1491 = vmatpush1.msra.mxu0 %v1430
    %1492 = vmatprep.subr.mxu0 0.0
    %1493 = vmatpush1.msra.mxu0 %v1431
    %1494 = vmatprep.subr.mxu0 0.0
    %1495 = vmatpush1.msra.mxu0 %v1432
    %1496 = vmatprep.subr.mxu0 0.0
    %1497 = vmatpush1.msra.mxu0 %v1433
    %1498 = vmatprep.subr.mxu0 0.0
    %1499 = vmatpush1.msra.mxu0 0.0
    %1500 = vmatprep.subr.mxu0 0.0
    %1501 = vmatpush1.msra.mxu0 0.0
    %1502 = vmatprep.subr.mxu0 0.0
    %1503 = vmatpush1.msra.mxu0 0.0
    %1504 = vmatprep.subr.mxu0 0.0
    %1505 = vmatpush1.msra.mxu0 0.0
    %1506 = vmatprep.subr.mxu0 0.0
    %1507 = vmatpush1.msra.mxu0 0.0
    %1508 = vmatprep.subr.mxu0 0.0
    %1509 = vmatpush1.msra.mxu0 0.0
    %1510 = vmatprep.subr.mxu0 0.0
    %1511 = vmatpush1.msra.mxu0 0.0
    %1512 = vmatprep.subr.mxu0 0.0
    %1513 = vmatpush1.msra.mxu0 0.0
    %1514 = vmatprep.subr.mxu0 0.0
    %1515 = vmatpush1.msra.mxu0 0.0
    %1516 = vmatprep.subr.mxu0 0.0
    %1517 = vmatpush1.msra.mxu0 0.0
    %1518 = vmatprep.subr.mxu0 0.0
    %1519 = vmatpush1.msra.mxu0 0.0
    %1520 = vmatprep.subr.mxu0 0.0
    %1521 = vmatpush1.msra.mxu0 0.0
    %1522 = vmatprep.subr.mxu0 0.0
    %1523 = vmatpush1.msra.mxu0 0.0
    %1524 = vmatprep.subr.mxu0 0.0
    %1525 = vmatpush1.msra.mxu0 0.0
    %1526 = vmatprep.subr.mxu0 0.0
    %1527 = vmatpush1.msra.mxu0 0.0
    %1528 = vmatprep.subr.mxu0 0.0
    %1529 = vmatpush1.msra.mxu0 0.0
    %1530 = vmatprep.subr.mxu0 0.0
    %1531 = vmatpush1.msra.mxu0 0.0
    %1532 = vmatprep.subr.mxu0 0.0
    %1533 = vmatpush1.msra.mxu0 0.0
    %1534 = vmatprep.subr.mxu0 0.0
    %1535 = vmatpush1.msra.mxu0 0.0
    %1536 = vmatprep.subr.mxu0 0.0
    %1537 = vmatpush1.msra.mxu0 0.0
    %1538 = vmatprep.subr.mxu0 0.0
    %1539 = vmatpush1.msra.mxu0 0.0
    %1540 = vmatprep.subr.mxu0 0.0
    %1541 = vmatpush1.msra.mxu0 0.0
    %1542 = vmatprep.subr.mxu0 0.0
    %1543 = vmatpush1.msra.mxu0 0.0
    %1544 = vmatprep.subr.mxu0 0.0
    %1545 = vmatpush1.msra.mxu0 0.0
    %1546 = vmatprep.subr.mxu0 0.0
    %1547 = vmatpush1.msra.mxu0 0.0
    %1548 = vmatprep.subr.mxu0 0.0
    %1549 = vmatpush1.msra.mxu0 0.0
    %1550 = vmatprep.subr.mxu0 0.0
    %1551 = vmatpush1.msra.mxu0 0.0
    %1552 = vmatprep.subr.mxu0 0.0
    %1553 = vmatpush1.msra.mxu0 0.0
    %1554 = vmatprep.mubr.f32.mxu0 0.0
    %1555 = vmatmul.mubr.f32.gmra.mrb[0].mxu0 %v1484
    %v1556 = vpop.f32.mrb[0].mxu0
    %v1557 = vadd.f32 0.0, %v1556
    %v1558 = vpop.f32.mrb[0].mxu0
    %1559 = vmatprep.mubr.f32.mxu0 0.0
    %1560 = vmatmul.mubr.f32.gmra.mrb[0].mxu0 %v1486
    %v1561 = vpop.f32.mrb[0].mxu0
    %v1562 = vadd.f32 0.0, %v1561
    %v1563 = vpop.f32.mrb[0].mxu0
    %1564 = vmatprep.mubr.f32.mxu0 0.0
    %1565 = vmatmul.mubr.f32.gmra.mrb[0].mxu0 %v1488
    %v1566 = vpop.f32.mrb[0].mxu0
    %v1567 = vadd.f32 0.0, %v1566
    %v1568 = vpop.f32.mrb[0].mxu0
    %1569 = vdwg.mxu0
    %v1573 = vcombine.high %v1557, %v1557
    %v1575 = vunpack.c.l.s4 1966171168
    %v1576 = vunpack.c.0.s8 %v1575
    %v1577 = vlaneseq
    %v1578 = vshrl.u32 %v1577, 7
    %v1579 = vsub.s32 %v1576, %v1578
    %v1580 = vrot.slane %v1557, %v1579
    %v1582 = vunpack.c.l.s4 1966171168
    %v1583 = vunpack.c.0.s8 %v1582
    %v1584 = vlaneseq
    %v1585 = vshrl.u32 %v1584, 7
    %v1586 = vsub.s32 %v1583, %v1585
    %v1587 = vrot.slane %v1573, %v1586
    %v1588 = vcombine.high %v1580, %v1580
    %v1589 = vcombine.high %v1587, %v1587
    %v1591 = vunpack.c.l.s4 1966171168
    %v1592 = vunpack.c.0.s8 %v1591
    %v1593 = vlaneseq
    %v1594 = vshrl.u32 %v1593, 7
    %v1595 = vsub.s32 %v1592, %v1594
    %v1596 = vrot.slane %v1580, %v1595
    %v1598 = vunpack.c.l.s4 1966171168
    %v1599 = vunpack.c.0.s8 %v1598
    %v1600 = vlaneseq
    %v1601 = vshrl.u32 %v1600, 7
    %v1602 = vsub.s32 %v1599, %v1601
    %v1603 = vrot.slane %v1587, %v1602
    %v1605 = vunpack.c.l.s4 1966171168
    %v1606 = vunpack.c.0.s8 %v1605
    %v1607 = vlaneseq
    %v1608 = vshrl.u32 %v1607, 7
    %v1609 = vsub.s32 %v1606, %v1608
    %v1610 = vrot.slane %v1588, %v1609
    %v1612 = vunpack.c.l.s4 1966171168
    %v1613 = vunpack.c.0.s8 %v1612
    %v1614 = vlaneseq
    %v1615 = vshrl.u32 %v1614, 7
    %v1616 = vsub.s32 %v1613, %v1615
    %v1617 = vrot.slane %v1589, %v1616
    %v1618 = vcombine.high %v1596, %v1596
    %v1619 = vcombine.high %v1603, %v1603
    %v1620 = vcombine.high %v1610, %v1610
    %v1621 = vcombine.high %v1617, %v1617
    %v1622 = vcombine.high %v1562, %v1562
    %v1624 = vunpack.c.l.s4 1966171168
    %v1625 = vunpack.c.0.s8 %v1624
    %v1626 = vlaneseq
    %v1627 = vshrl.u32 %v1626, 7
    %v1628 = vsub.s32 %v1625, %v1627
    %v1629 = vrot.slane %v1562, %v1628
    %v1631 = vunpack.c.l.s4 1966171168
    %v1632 = vunpack.c.0.s8 %v1631
    %v1633 = vlaneseq
    %v1634 = vshrl.u32 %v1633, 7
    %v1635 = vsub.s32 %v1632, %v1634
    %v1636 = vrot.slane %v1622, %v1635
    %v1637 = vcombine.high %v1629, %v1629
    %v1638 = vcombine.high %v1636, %v1636
    %v1640 = vunpack.c.l.s4 1966171168
    %v1641 = vunpack.c.0.s8 %v1640
    %v1642 = vlaneseq
    %v1643 = vshrl.u32 %v1642, 7
    %v1644 = vsub.s32 %v1641, %v1643
    %v1645 = vrot.slane %v1629, %v1644
    %v1647 = vunpack.c.l.s4 1966171168
    %v1648 = vunpack.c.0.s8 %v1647
    %v1649 = vlaneseq
    %v1650 = vshrl.u32 %v1649, 7
    %v1651 = vsub.s32 %v1648, %v1650
    %v1652 = vrot.slane %v1636, %v1651
    %v1654 = vunpack.c.l.s4 1966171168
    %v1655 = vunpack.c.0.s8 %v1654
    %v1656 = vlaneseq
    %v1657 = vshrl.u32 %v1656, 7
    %v1658 = vsub.s32 %v1655, %v1657
    %v1659 = vrot.slane %v1637, %v1658
    %v1661 = vunpack.c.l.s4 1966171168
    %v1662 = vunpack.c.0.s8 %v1661
    %v1663 = vlaneseq
    %v1664 = vshrl.u32 %v1663, 7
    %v1665 = vsub.s32 %v1662, %v1664
    %v1666 = vrot.slane %v1638, %v1665
    %v1667 = vcombine.high %v1645, %v1645
    %v1668 = vcombine.high %v1652, %v1652
    %v1669 = vcombine.high %v1659, %v1659
    %v1670 = vcombine.high %v1666, %v1666
    %v1671 = vcombine.high %v1567, %v1567
    %v1673 = vunpack.c.l.s4 1966171168
    %v1674 = vunpack.c.0.s8 %v1673
    %v1675 = vlaneseq
    %v1676 = vshrl.u32 %v1675, 7
    %v1677 = vsub.s32 %v1674, %v1676
    %v1678 = vrot.slane %v1567, %v1677
    %v1680 = vunpack.c.l.s4 1966171168
    %v1681 = vunpack.c.0.s8 %v1680
    %v1682 = vlaneseq
    %v1683 = vshrl.u32 %v1682, 7
    %v1684 = vsub.s32 %v1681, %v1683
    %v1685 = vrot.slane %v1671, %v1684
    %v1686 = vcombine.high %v1678, %v1678
    %v1687 = vcombine.high %v1685, %v1685
    %v1689 = vunpack.c.l.s4 1966171168
    %v1690 = vunpack.c.0.s8 %v1689
    %v1691 = vlaneseq
    %v1692 = vshrl.u32 %v1691, 7
    %v1693 = vsub.s32 %v1690, %v1692
    %v1694 = vrot.slane %v1678, %v1693
    %v1696 = vunpack.c.l.s4 1966171168
    %v1697 = vunpack.c.0.s8 %v1696
    %v1698 = vlaneseq
    %v1699 = vshrl.u32 %v1698, 7
    %v1700 = vsub.s32 %v1697, %v1699
    %v1701 = vrot.slane %v1685, %v1700
    %v1703 = vunpack.c.l.s4 1966171168
    %v1704 = vunpack.c.0.s8 %v1703
    %v1705 = vlaneseq
    %v1706 = vshrl.u32 %v1705, 7
    %v1707 = vsub.s32 %v1704, %v1706
    %v1708 = vrot.slane %v1686, %v1707
    %v1710 = vunpack.c.l.s4 1966171168
    %v1711 = vunpack.c.0.s8 %v1710
    %v1712 = vlaneseq
    %v1713 = vshrl.u32 %v1712, 7
    %v1714 = vsub.s32 %v1711, %v1713
    %v1715 = vrot.slane %v1687, %v1714
    %v1716 = vcombine.high %v1694, %v1694
    %v1717 = vcombine.high %v1701, %v1701
    %v1718 = vcombine.high %v1708, %v1708
    %v1719 = vcombine.high %v1715, %v1715
    %v1744 = vld [vmem:[%s8] sm:$0xff]
    %v1745 = vld [vmem:[%s8 + $0x8] sm:$0xff]
    %v1746 = vld [vmem:[%s9] sm:$0x1]
    %v1748 = vlaneseq
    %v1749 = vshrl.u32 %v1748, 7
    %v1750 = vsub.s32 0, %v1749
    %v1751 = vrot.slane %v1746, %v1750
    %1753 = vmatprep.subr.mxu0 0.0
    %1754 = vmatpush1.msra.mxu0 %v1744
    %1755 = vmatprep.subr.mxu0 0.0
    %1756 = vmatpush1.msra.mxu0 %v1745
    %1757 = vmatprep.subr.mxu0 0.0
    %1758 = vmatpush1.msra.mxu0 0.0
    %1759 = vmatprep.subr.mxu0 0.0
    %1760 = vmatpush1.msra.mxu0 0.0
    %1761 = vmatprep.subr.mxu0 0.0
    %1762 = vmatpush1.msra.mxu0 0.0
    %1763 = vmatprep.subr.mxu0 0.0
    %1764 = vmatpush1.msra.mxu0 0.0
    %1765 = vmatprep.subr.mxu0 0.0
    %1766 = vmatpush1.msra.mxu0 0.0
    %1767 = vmatprep.subr.mxu0 0.0
    %1768 = vmatpush1.msra.mxu0 0.0
    %1769 = vmatprep.subr.mxu0 0.0
    %1770 = vmatpush1.msra.mxu0 0.0
    %1771 = vmatprep.subr.mxu0 0.0
    %1772 = vmatpush1.msra.mxu0 0.0
    %1773 = vmatprep.subr.mxu0 0.0
    %1774 = vmatpush1.msra.mxu0 0.0
    %1775 = vmatprep.subr.mxu0 0.0
    %1776 = vmatpush1.msra.mxu0 0.0
    %1777 = vmatprep.subr.mxu0 0.0
    %1778 = vmatpush1.msra.mxu0 0.0
    %1779 = vmatprep.subr.mxu0 0.0
    %1780 = vmatpush1.msra.mxu0 0.0
    %1781 = vmatprep.subr.mxu0 0.0
    %1782 = vmatpush1.msra.mxu0 0.0
    %1783 = vmatprep.subr.mxu0 0.0
    %1784 = vmatpush1.msra.mxu0 0.0
    %1785 = vmatprep.subr.mxu0 0.0
    %1786 = vmatpush1.msra.mxu0 0.0
    %1787 = vmatprep.subr.mxu0 0.0
    %1788 = vmatpush1.msra.mxu0 0.0
    %1789 = vmatprep.subr.mxu0 0.0
    %1790 = vmatpush1.msra.mxu0 0.0
    %1791 = vmatprep.subr.mxu0 0.0
    %1792 = vmatpush1.msra.mxu0 0.0
    %1793 = vmatprep.subr.mxu0 0.0
    %1794 = vmatpush1.msra.mxu0 0.0
    %1795 = vmatprep.subr.mxu0 0.0
    %1796 = vmatpush1.msra.mxu0 0.0
    %1797 = vmatprep.subr.mxu0 0.0
    %1798 = vmatpush1.msra.mxu0 0.0
    %1799 = vmatprep.subr.mxu0 0.0
    %1800 = vmatpush1.msra.mxu0 0.0
    %1801 = vmatprep.subr.mxu0 0.0
    %1802 = vmatpush1.msra.mxu0 0.0
    %1803 = vmatprep.subr.mxu0 0.0
    %1804 = vmatpush1.msra.mxu0 0.0
    %1805 = vmatprep.subr.mxu0 0.0
    %1806 = vmatpush1.msra.mxu0 0.0
    %1807 = vmatprep.subr.mxu0 0.0
    %1808 = vmatpush1.msra.mxu0 0.0
    %1809 = vmatprep.subr.mxu0 0.0
    %1810 = vmatpush1.msra.mxu0 0.0
    %1811 = vmatprep.subr.mxu0 0.0
    %1812 = vmatpush1.msra.mxu0 0.0
    %1813 = vmatprep.subr.mxu0 0.0
    %1814 = vmatpush1.msra.mxu0 0.0
    %1815 = vmatprep.subr.mxu0 0.0
    %1816 = vmatpush1.msra.mxu0 0.0
    %1817 = vmatprep.mubr.f32.mxu0 0.0
    %1818 = vmatmul.mubr.f32.gmra.mrb[0].mxu0 %v383
    %v1819 = vpop.f32.mrb[0].mxu0
    %v1820 = vadd.f32 %v1751, %v1819
    %v1821 = vpop.f32.mrb[0].mxu0
    %1822 = vdwg.mxu0
    %v1824 = vcombine.high %v1820, %v1820
    %v1826 = vunpack.c.l.s4 1966171168
    %v1827 = vunpack.c.0.s8 %v1826
    %v1828 = vlaneseq
    %v1829 = vshrl.u32 %v1828, 7
    %v1830 = vsub.s32 %v1827, %v1829
    %v1831 = vrot.slane %v1820, %v1830
    %v1833 = vunpack.c.l.s4 1966171168
    %v1834 = vunpack.c.0.s8 %v1833
    %v1835 = vlaneseq
    %v1836 = vshrl.u32 %v1835, 7
    %v1837 = vsub.s32 %v1834, %v1836
    %v1838 = vrot.slane %v1824, %v1837
    %v1839 = vcombine.high %v1831, %v1831
    %v1840 = vcombine.high %v1838, %v1838
    %v1842 = vunpack.c.l.s4 1966171168
    %v1843 = vunpack.c.0.s8 %v1842
    %v1844 = vlaneseq
    %v1845 = vshrl.u32 %v1844, 7
    %v1846 = vsub.s32 %v1843, %v1845
    %v1847 = vrot.slane %v1831, %v1846
    %v1849 = vunpack.c.l.s4 1966171168
    %v1850 = vunpack.c.0.s8 %v1849
    %v1851 = vlaneseq
    %v1852 = vshrl.u32 %v1851, 7
    %v1853 = vsub.s32 %v1850, %v1852
    %v1854 = vrot.slane %v1838, %v1853
    %v1856 = vunpack.c.l.s4 1966171168
    %v1857 = vunpack.c.0.s8 %v1856
    %v1858 = vlaneseq
    %v1859 = vshrl.u32 %v1858, 7
    %v1860 = vsub.s32 %v1857, %v1859
    %v1861 = vrot.slane %v1839, %v1860
    %v1863 = vunpack.c.l.s4 1966171168
    %v1864 = vunpack.c.0.s8 %v1863
    %v1865 = vlaneseq
    %v1866 = vshrl.u32 %v1865, 7
    %v1867 = vsub.s32 %v1864, %v1866
    %v1868 = vrot.slane %v1840, %v1867
    %v1869 = vcombine.high %v1847, %v1847
    %v1870 = vcombine.high %v1854, %v1854
    %v1871 = vcombine.high %v1861, %v1861
    %v1872 = vcombine.high %v1868, %v1868
    %v1873 = vlaneseq
    %v1874 = vshrl.u32 %v1873, 7
    %v1875 = vsub.s32 0, %v1874
    %v1876 = vrot.slane %v1847, %v1875
    %v1877 = vlaneseq
    %v1878 = vshrl.u32 %v1877, 7
    %v1879 = vsub.s32 0, %v1878
    %v1880 = vrot.slane %v1861, %v1879
    %v1881 = vlaneseq
    %v1882 = vshrl.u32 %v1881, 7
    %v1883 = vsub.s32 0, %v1882
    %v1884 = vrot.slane %v1869, %v1883
    %v1885 = vlaneseq
    %v1886 = vshrl.u32 %v1885, 7
    %v1887 = vsub.s32 0, %v1886
    %v1888 = vrot.slane %v1871, %v1887
    %v1889 = vlaneseq
    %v1890 = vshrl.u32 %v1889, 7
    %v1891 = vsub.s32 0, %v1890
    %v1892 = vrot.slane %v1854, %v1891
    %v1893 = vlaneseq
    %v1894 = vshrl.u32 %v1893, 7
    %v1895 = vsub.s32 0, %v1894
    %v1896 = vrot.slane %v1868, %v1895
    %v1897 = vlaneseq
    %v1898 = vshrl.u32 %v1897, 7
    %v1899 = vsub.s32 0, %v1898
    %v1900 = vrot.slane %v1870, %v1899
    %v1901 = vlaneseq
    %v1902 = vshrl.u32 %v1901, 7
    %v1903 = vsub.s32 0, %v1902
    %v1904 = vrot.slane %v1872, %v1903
    %v1906 = vunpack.c.l.s4 1966171168
    %v1907 = vunpack.c.0.s8 %v1906
    %v1908 = vlaneseq
    %v1909 = vshrl.u32 %v1908, 7
    %v1910 = vsub.s32 %v1907, %v1909
    %v1911 = vrot.slane %v1876, %v1910
    %v1912 = vcombine.high %v1911, %v1911
    %v1914 = vunpack.c.l.s4 1966171168
    %v1915 = vunpack.c.0.s8 %v1914
    %v1916 = vlaneseq
    %v1917 = vshrl.u32 %v1916, 7
    %v1918 = vsub.s32 %v1915, %v1917
    %v1919 = vrot.slane %v1911, %v1918
    %v1921 = vunpack.c.l.s4 1966171168
    %v1922 = vunpack.c.0.s8 %v1921
    %v1923 = vlaneseq
    %v1924 = vshrl.u32 %v1923, 7
    %v1925 = vsub.s32 %v1922, %v1924
    %v1926 = vrot.slane %v1912, %v1925
    %v1927 = vcombine.high %v1919, %v1919
    %v1929 = vunpack.c.l.s4 1966171168
    %v1930 = vunpack.c.0.s8 %v1929
    %v1931 = vlaneseq
    %v1932 = vshrl.u32 %v1931, 7
    %v1933 = vsub.s32 %v1930, %v1932
    %v1934 = vrot.slane %v1880, %v1933
    %v1935 = vcombine.high %v1934, %v1934
    %v1937 = vunpack.c.l.s4 1966171168
    %v1938 = vunpack.c.0.s8 %v1937
    %v1939 = vlaneseq
    %v1940 = vshrl.u32 %v1939, 7
    %v1941 = vsub.s32 %v1938, %v1940
    %v1942 = vrot.slane %v1934, %v1941
    %v1944 = vunpack.c.l.s4 1966171168
    %v1945 = vunpack.c.0.s8 %v1944
    %v1946 = vlaneseq
    %v1947 = vshrl.u32 %v1946, 7
    %v1948 = vsub.s32 %v1945, %v1947
    %v1949 = vrot.slane %v1935, %v1948
    %v1950 = vcombine.high %v1942, %v1942
    %v1952 = vunpack.c.l.s4 1966171168
    %v1953 = vunpack.c.0.s8 %v1952
    %v1954 = vlaneseq
    %v1955 = vshrl.u32 %v1954, 7
    %v1956 = vsub.s32 %v1953, %v1955
    %v1957 = vrot.slane %v1884, %v1956
    %v1958 = vcombine.high %v1957, %v1957
    %v1960 = vunpack.c.l.s4 1966171168
    %v1961 = vunpack.c.0.s8 %v1960
    %v1962 = vlaneseq
    %v1963 = vshrl.u32 %v1962, 7
    %v1964 = vsub.s32 %v1961, %v1963
    %v1965 = vrot.slane %v1957, %v1964
    %v1967 = vunpack.c.l.s4 1966171168
    %v1968 = vunpack.c.0.s8 %v1967
    %v1969 = vlaneseq
    %v1970 = vshrl.u32 %v1969, 7
    %v1971 = vsub.s32 %v1968, %v1970
    %v1972 = vrot.slane %v1958, %v1971
    %v1973 = vcombine.high %v1965, %v1965
    %v1975 = vunpack.c.l.s4 1966171168
    %v1976 = vunpack.c.0.s8 %v1975
    %v1977 = vlaneseq
    %v1978 = vshrl.u32 %v1977, 7
    %v1979 = vsub.s32 %v1976, %v1978
    %v1980 = vrot.slane %v1888, %v1979
    %v1981 = vcombine.high %v1980, %v1980
    %v1983 = vunpack.c.l.s4 1966171168
    %v1984 = vunpack.c.0.s8 %v1983
    %v1985 = vlaneseq
    %v1986 = vshrl.u32 %v1985, 7
    %v1987 = vsub.s32 %v1984, %v1986
    %v1988 = vrot.slane %v1980, %v1987
    %v1990 = vunpack.c.l.s4 1966171168
    %v1991 = vunpack.c.0.s8 %v1990
    %v1992 = vlaneseq
    %v1993 = vshrl.u32 %v1992, 7
    %v1994 = vsub.s32 %v1991, %v1993
    %v1995 = vrot.slane %v1981, %v1994
    %v1996 = vcombine.high %v1988, %v1988
    %v1998 = vunpack.c.l.s4 1966171168
    %v1999 = vunpack.c.0.s8 %v1998
    %v2000 = vlaneseq
    %v2001 = vshrl.u32 %v2000, 7
    %v2002 = vsub.s32 %v1999, %v2001
    %v2003 = vrot.slane %v1892, %v2002
    %v2004 = vcombine.high %v2003, %v2003
    %v2006 = vunpack.c.l.s4 1966171168
    %v2007 = vunpack.c.0.s8 %v2006
    %v2008 = vlaneseq
    %v2009 = vshrl.u32 %v2008, 7
    %v2010 = vsub.s32 %v2007, %v2009
    %v2011 = vrot.slane %v2003, %v2010
    %v2013 = vunpack.c.l.s4 1966171168
    %v2014 = vunpack.c.0.s8 %v2013
    %v2015 = vlaneseq
    %v2016 = vshrl.u32 %v2015, 7
    %v2017 = vsub.s32 %v2014, %v2016
    %v2018 = vrot.slane %v2004, %v2017
    %v2019 = vcombine.high %v2011, %v2011
    %v2021 = vunpack.c.l.s4 1966171168
    %v2022 = vunpack.c.0.s8 %v2021
    %v2023 = vlaneseq
    %v2024 = vshrl.u32 %v2023, 7
    %v2025 = vsub.s32 %v2022, %v2024
    %v2026 = vrot.slane %v1896, %v2025
    %v2027 = vcombine.high %v2026, %v2026
    %v2029 = vunpack.c.l.s4 1966171168
    %v2030 = vunpack.c.0.s8 %v2029
    %v2031 = vlaneseq
    %v2032 = vshrl.u32 %v2031, 7
    %v2033 = vsub.s32 %v2030, %v2032
    %v2034 = vrot.slane %v2026, %v2033
    %v2036 = vunpack.c.l.s4 1966171168
    %v2037 = vunpack.c.0.s8 %v2036
    %v2038 = vlaneseq
    %v2039 = vshrl.u32 %v2038, 7
    %v2040 = vsub.s32 %v2037, %v2039
    %v2041 = vrot.slane %v2027, %v2040
    %v2042 = vcombine.high %v2034, %v2034
    %v2044 = vunpack.c.l.s4 1966171168
    %v2045 = vunpack.c.0.s8 %v2044
    %v2046 = vlaneseq
    %v2047 = vshrl.u32 %v2046, 7
    %v2048 = vsub.s32 %v2045, %v2047
    %v2049 = vrot.slane %v1900, %v2048
    %v2050 = vcombine.high %v2049, %v2049
    %v2052 = vunpack.c.l.s4 1966171168
    %v2053 = vunpack.c.0.s8 %v2052
    %v2054 = vlaneseq
    %v2055 = vshrl.u32 %v2054, 7
    %v2056 = vsub.s32 %v2053, %v2055
    %v2057 = vrot.slane %v2049, %v2056
    %v2059 = vunpack.c.l.s4 1966171168
    %v2060 = vunpack.c.0.s8 %v2059
    %v2061 = vlaneseq
    %v2062 = vshrl.u32 %v2061, 7
    %v2063 = vsub.s32 %v2060, %v2062
    %v2064 = vrot.slane %v2050, %v2063
    %v2065 = vcombine.high %v2057, %v2057
    %v2067 = vunpack.c.l.s4 1966171168
    %v2068 = vunpack.c.0.s8 %v2067
    %v2069 = vlaneseq
    %v2070 = vshrl.u32 %v2069, 7
    %v2071 = vsub.s32 %v2068, %v2070
    %v2072 = vrot.slane %v1904, %v2071
    %v2073 = vcombine.high %v2072, %v2072
    %v2075 = vunpack.c.l.s4 1966171168
    %v2076 = vunpack.c.0.s8 %v2075
    %v2077 = vlaneseq
    %v2078 = vshrl.u32 %v2077, 7
    %v2079 = vsub.s32 %v2076, %v2078
    %v2080 = vrot.slane %v2072, %v2079
    %v2082 = vunpack.c.l.s4 1966171168
    %v2083 = vunpack.c.0.s8 %v2082
    %v2084 = vlaneseq
    %v2085 = vshrl.u32 %v2084, 7
    %v2086 = vsub.s32 %v2083, %v2085
    %v2087 = vrot.slane %v2073, %v2086
    %v2088 = vcombine.high %v2080, %v2080
    %v2113 = vadd.f32 %v1596, %v1919
    %v2114 = vadd.f32 %v1610, %v1926
    %v2115 = vadd.f32 %v1618, %v1927
    %v2116 = vadd.f32 %v1620, %v1942
    %v2117 = vadd.f32 %v1603, %v1949
    %v2118 = vadd.f32 %v1617, %v1950
    %v2119 = vadd.f32 %v1619, %v1965
    %v2120 = vadd.f32 %v1621, %v1972
    %v2121 = vadd.f32 %v1645, %v1973
    %v2122 = vadd.f32 %v1659, %v1988
    %v2123 = vadd.f32 %v1667, %v1995
    %v2124 = vadd.f32 %v1669, %v1996
    %v2125 = vadd.f32 %v1652, %v2011
    %v2126 = vadd.f32 %v1666, %v2018
    %v2127 = vadd.f32 %v1668, %v2019
    %v2128 = vadd.f32 %v1670, %v2034
    %v2129 = vadd.f32 %v1694, %v2041
    %v2130 = vadd.f32 %v1708, %v2042
    %v2131 = vadd.f32 %v1716, %v2057
    %v2132 = vadd.f32 %v1718, %v2064
    %v2133 = vadd.f32 %v1701, %v2065
    %v2134 = vadd.f32 %v1715, %v2080
    %v2135 = vadd.f32 %v1717, %v2087
    %v2136 = vadd.f32 %v1719, %v2088
    %v2137 = vtanh.pop %v2113
    %v2138 = vtanh.pop %v2114
    %v2139 = vtanh.pop %v2115
    %v2140 = vtanh.pop %v2116
    %v2141 = vtanh.pop %v2117
    %v2142 = vtanh.pop %v2118
    %v2143 = vtanh.pop %v2119
    %v2144 = vtanh.pop %v2120
    %v2145 = vtanh.pop %v2121
    %v2146 = vtanh.pop %v2122
    %v2147 = vtanh.pop %v2123
    %v2148 = vtanh.pop %v2124
    %v2149 = vtanh.pop %v2125
    %v2150 = vtanh.pop %v2126
    %v2151 = vtanh.pop %v2127
    %v2152 = vtanh.pop %v2128
    %v2153 = vtanh.pop %v2129
    %v2154 = vtanh.pop %v2130
    %v2155 = vtanh.pop %v2131
    %v2156 = vtanh.pop %v2132
    %v2157 = vtanh.pop %v2133
    %v2158 = vtanh.pop %v2134
    %v2159 = vtanh.pop %v2135
    %v2160 = vtanh.pop %v2136
    %v2161 = vld [vmem:[%s10] sm:$0x1]
    %v2163 = vlaneseq
    %v2164 = vshrl.u32 %v2163, 7
    %v2165 = vsub.s32 0, %v2164
    %v2166 = vrot.slane %v2161, %v2165
    %v2168 = vunpack.c.l.s4 1966171168
    %v2169 = vunpack.c.0.s8 %v2168
    %v2170 = vlaneseq
    %v2171 = vshrl.u32 %v2170, 7
    %v2172 = vsub.s32 %v2169, %v2171
    %v2173 = vrot.slane %v2166, %v2172
    %v2174 = vcombine.high %v2173, %v2173
    %v2176 = vunpack.c.l.s4 1966171168
    %v2177 = vunpack.c.0.s8 %v2176
    %v2178 = vlaneseq
    %v2179 = vshrl.u32 %v2178, 7
    %v2180 = vsub.s32 %v2177, %v2179
    %v2181 = vrot.slane %v2173, %v2180
    %v2183 = vunpack.c.l.s4 1966171168
    %v2184 = vunpack.c.0.s8 %v2183
    %v2185 = vlaneseq
    %v2186 = vshrl.u32 %v2185, 7
    %v2187 = vsub.s32 %v2184, %v2186
    %v2188 = vrot.slane %v2174, %v2187
    %v2189 = vcombine.high %v2181, %v2181
    %v2193 = vmul.f32 %v2137, %v2181
    %v2194 = vmul.f32 %v2138, %v2188
    %v2195 = vmul.f32 %v2139, %v2189
    %v2196 = vmul.f32 %v2140, %v2181
    %v2197 = vmul.f32 %v2141, %v2188
    %v2198 = vmul.f32 %v2142, %v2189
    %v2199 = vmul.f32 %v2143, %v2181
    %v2200 = vmul.f32 %v2144, %v2188
    %v2201 = vmul.f32 %v2145, %v2189
    %v2202 = vmul.f32 %v2146, %v2181
    %v2203 = vmul.f32 %v2147, %v2188
    %v2204 = vmul.f32 %v2148, %v2189
    %v2205 = vmul.f32 %v2149, %v2181
    %v2206 = vmul.f32 %v2150, %v2188
    %v2207 = vmul.f32 %v2151, %v2189
    %v2208 = vmul.f32 %v2152, %v2181
    %v2209 = vmul.f32 %v2153, %v2188
    %v2210 = vmul.f32 %v2154, %v2189
    %v2211 = vmul.f32 %v2155, %v2181
    %v2212 = vmul.f32 %v2156, %v2188
    %v2213 = vmul.f32 %v2157, %v2189
    %v2214 = vmul.f32 %v2158, %v2181
    %v2215 = vmul.f32 %v2159, %v2188
    %v2216 = vmul.f32 %v2160, %v2189
    %v2241 = vcombine.low %v2193, %v2194
    %v2243 = vunpack.c.l.s4 1966171168
    %v2244 = vunpack.c.0.s8 %v2243
    %v2245 = vlaneseq
    %v2246 = vshrl.u32 %v2245, 7
    %v2247 = vsub.s32 %v2244, %v2246
    %v2248 = vrot.slane %v2241, %v2247
    %v2250 = vunpack.c.l.s4 1966171168
    %v2251 = vunpack.c.0.s8 %v2250
    %v2252 = vlaneseq
    %v2253 = vshrl.u32 %v2252, 7
    %v2254 = vsub.s32 %v2251, %v2253
    %v2255 = vrot.slane %v2195, %v2254
    %v2256 = vcombine.low %v2248, %v2255
    %v2258 = vunpack.c.l.s4 1966171168
    %v2259 = vunpack.c.0.s8 %v2258
    %v2260 = vlaneseq
    %v2261 = vshrl.u32 %v2260, 7
    %v2262 = vsub.s32 %v2259, %v2261
    %v2263 = vrot.slane %v2256, %v2262
    %v2264 = vcombine.low %v2196, %v2197
    %v2266 = vunpack.c.l.s4 1966171168
    %v2267 = vunpack.c.0.s8 %v2266
    %v2268 = vlaneseq
    %v2269 = vshrl.u32 %v2268, 7
    %v2270 = vsub.s32 %v2267, %v2269
    %v2271 = vrot.slane %v2264, %v2270
    %v2273 = vunpack.c.l.s4 1966171168
    %v2274 = vunpack.c.0.s8 %v2273
    %v2275 = vlaneseq
    %v2276 = vshrl.u32 %v2275, 7
    %v2277 = vsub.s32 %v2274, %v2276
    %v2278 = vrot.slane %v2198, %v2277
    %v2279 = vcombine.low %v2271, %v2278
    %v2281 = vunpack.c.l.s4 1966171168
    %v2282 = vunpack.c.0.s8 %v2281
    %v2283 = vlaneseq
    %v2284 = vshrl.u32 %v2283, 7
    %v2285 = vsub.s32 %v2282, %v2284
    %v2286 = vrot.slane %v2279, %v2285
    %v2287 = vcombine.low %v2199, %v2200
    %v2289 = vunpack.c.l.s4 1966171168
    %v2290 = vunpack.c.0.s8 %v2289
    %v2291 = vlaneseq
    %v2292 = vshrl.u32 %v2291, 7
    %v2293 = vsub.s32 %v2290, %v2292
    %v2294 = vrot.slane %v2287, %v2293
    %v2296 = vunpack.c.l.s4 1966171168
    %v2297 = vunpack.c.0.s8 %v2296
    %v2298 = vlaneseq
    %v2299 = vshrl.u32 %v2298, 7
    %v2300 = vsub.s32 %v2297, %v2299
    %v2301 = vrot.slane %v2201, %v2300
    %v2302 = vcombine.low %v2294, %v2301
    %v2304 = vunpack.c.l.s4 1966171168
    %v2305 = vunpack.c.0.s8 %v2304
    %v2306 = vlaneseq
    %v2307 = vshrl.u32 %v2306, 7
    %v2308 = vsub.s32 %v2305, %v2307
    %v2309 = vrot.slane %v2302, %v2308
    %v2310 = vcombine.low %v2202, %v2203
    %v2312 = vunpack.c.l.s4 1966171168
    %v2313 = vunpack.c.0.s8 %v2312
    %v2314 = vlaneseq
    %v2315 = vshrl.u32 %v2314, 7
    %v2316 = vsub.s32 %v2313, %v2315
    %v2317 = vrot.slane %v2310, %v2316
    %v2319 = vunpack.c.l.s4 1966171168
    %v2320 = vunpack.c.0.s8 %v2319
    %v2321 = vlaneseq
    %v2322 = vshrl.u32 %v2321, 7
    %v2323 = vsub.s32 %v2320, %v2322
    %v2324 = vrot.slane %v2204, %v2323
    %v2325 = vcombine.low %v2317, %v2324
    %v2327 = vunpack.c.l.s4 1966171168
    %v2328 = vunpack.c.0.s8 %v2327
    %v2329 = vlaneseq
    %v2330 = vshrl.u32 %v2329, 7
    %v2331 = vsub.s32 %v2328, %v2330
    %v2332 = vrot.slane %v2325, %v2331
    %v2333 = vcombine.low %v2205, %v2206
    %v2335 = vunpack.c.l.s4 1966171168
    %v2336 = vunpack.c.0.s8 %v2335
    %v2337 = vlaneseq
    %v2338 = vshrl.u32 %v2337, 7
    %v2339 = vsub.s32 %v2336, %v2338
    %v2340 = vrot.slane %v2333, %v2339
    %v2342 = vunpack.c.l.s4 1966171168
    %v2343 = vunpack.c.0.s8 %v2342
    %v2344 = vlaneseq
    %v2345 = vshrl.u32 %v2344, 7
    %v2346 = vsub.s32 %v2343, %v2345
    %v2347 = vrot.slane %v2207, %v2346
    %v2348 = vcombine.low %v2340, %v2347
    %v2350 = vunpack.c.l.s4 1966171168
    %v2351 = vunpack.c.0.s8 %v2350
    %v2352 = vlaneseq
    %v2353 = vshrl.u32 %v2352, 7
    %v2354 = vsub.s32 %v2351, %v2353
    %v2355 = vrot.slane %v2348, %v2354
    %v2356 = vcombine.low %v2208, %v2209
    %v2358 = vunpack.c.l.s4 1966171168
    %v2359 = vunpack.c.0.s8 %v2358
    %v2360 = vlaneseq
    %v2361 = vshrl.u32 %v2360, 7
    %v2362 = vsub.s32 %v2359, %v2361
    %v2363 = vrot.slane %v2356, %v2362
    %v2365 = vunpack.c.l.s4 1966171168
    %v2366 = vunpack.c.0.s8 %v2365
    %v2367 = vlaneseq
    %v2368 = vshrl.u32 %v2367, 7
    %v2369 = vsub.s32 %v2366, %v2368
    %v2370 = vrot.slane %v2210, %v2369
    %v2371 = vcombine.low %v2363, %v2370
    %v2373 = vunpack.c.l.s4 1966171168
    %v2374 = vunpack.c.0.s8 %v2373
    %v2375 = vlaneseq
    %v2376 = vshrl.u32 %v2375, 7
    %v2377 = vsub.s32 %v2374, %v2376
    %v2378 = vrot.slane %v2371, %v2377
    %v2379 = vcombine.low %v2211, %v2212
    %v2381 = vunpack.c.l.s4 1966171168
    %v2382 = vunpack.c.0.s8 %v2381
    %v2383 = vlaneseq
    %v2384 = vshrl.u32 %v2383, 7
    %v2385 = vsub.s32 %v2382, %v2384
    %v2386 = vrot.slane %v2379, %v2385
    %v2388 = vunpack.c.l.s4 1966171168
    %v2389 = vunpack.c.0.s8 %v2388
    %v2390 = vlaneseq
    %v2391 = vshrl.u32 %v2390, 7
    %v2392 = vsub.s32 %v2389, %v2391
    %v2393 = vrot.slane %v2213, %v2392
    %v2394 = vcombine.low %v2386, %v2393
    %v2396 = vunpack.c.l.s4 1966171168
    %v2397 = vunpack.c.0.s8 %v2396
    %v2398 = vlaneseq
    %v2399 = vshrl.u32 %v2398, 7
    %v2400 = vsub.s32 %v2397, %v2399
    %v2401 = vrot.slane %v2394, %v2400
    %v2402 = vcombine.low %v2214, %v2215
    %v2404 = vunpack.c.l.s4 1966171168
    %v2405 = vunpack.c.0.s8 %v2404
    %v2406 = vlaneseq
    %v2407 = vshrl.u32 %v2406, 7
    %v2408 = vsub.s32 %v2405, %v2407
    %v2409 = vrot.slane %v2402, %v2408
    %v2411 = vunpack.c.l.s4 1966171168
    %v2412 = vunpack.c.0.s8 %v2411
    %v2413 = vlaneseq
    %v2414 = vshrl.u32 %v2413, 7
    %v2415 = vsub.s32 %v2412, %v2414
    %v2416 = vrot.slane %v2216, %v2415
    %v2417 = vcombine.low %v2409, %v2416
    %v2419 = vunpack.c.l.s4 1966171168
    %v2420 = vunpack.c.0.s8 %v2419
    %v2421 = vlaneseq
    %v2422 = vshrl.u32 %v2421, 7
    %v2423 = vsub.s32 %v2420, %v2422
    %v2424 = vrot.slane %v2417, %v2423
    %vm2433 = vcmask 124928
    %v2434 = vsel %vm2433, %v2263, 0.0
    %2435 = vadd.xlane.f32.xlu0 %v2434
    %v2436 = vpop.xlane.xlu0 %2435
    %v2437 = vsel %vm2433, %v2286, 0.0
    %2438 = vadd.xlane.f32.xlu0 %v2437
    %v2439 = vpop.xlane.xlu0 %2438
    %v2440 = vsel %vm2433, %v2309, 0.0
    %2441 = vadd.xlane.f32.xlu0 %v2440
    %v2442 = vpop.xlane.xlu0 %2441
    %v2443 = vsel %vm2433, %v2332, 0.0
    %2444 = vadd.xlane.f32.xlu0 %v2443
    %v2445 = vpop.xlane.xlu0 %2444
    %v2446 = vsel %vm2433, %v2355, 0.0
    %2447 = vadd.xlane.f32.xlu0 %v2446
    %v2448 = vpop.xlane.xlu0 %2447
    %v2449 = vsel %vm2433, %v2378, 0.0
    %2450 = vadd.xlane.f32.xlu0 %v2449
    %v2451 = vpop.xlane.xlu0 %2450
    %v2452 = vsel %vm2433, %v2401, 0.0
    %2453 = vadd.xlane.f32.xlu0 %v2452
    %v2454 = vpop.xlane.xlu0 %2453
    %v2455 = vsel %vm2433, %v2424, 0.0
    %2456 = vadd.xlane.f32.xlu0 %v2455
    %v2457 = vpop.xlane.xlu0 %2456
    %v2458 = vstv %s108
    %v2459 = vadd.f32 %v2436, %v2458
    %v2460 = vadd.f32 %v2439, %v2458
    %v2461 = vadd.f32 %v2442, %v2458
    %v2462 = vadd.f32 %v2445, %v2458
    %v2463 = vadd.f32 %v2448, %v2458
    %v2464 = vadd.f32 %v2451, %v2458
    %v2465 = vadd.f32 %v2454, %v2458
    %v2466 = vadd.f32 %v2457, %v2458
    %v2475 = vlaneseq
    %v2476 = vshrl.u32 %v2475, 7
    %v2477 = vsub.s32 %v722, %v2476
    %v2478 = vrot.slane %v2459, %v2477
    %v2479 = vlaneseq
    %v2480 = vshrl.u32 %v2479, 7
    %v2481 = vsub.s32 %v722, %v2480
    %v2482 = vrot.slane %v2460, %v2481
    %v2483 = vlaneseq
    %v2484 = vshrl.u32 %v2483, 7
    %v2485 = vsub.s32 %v722, %v2484
    %v2486 = vrot.slane %v2461, %v2485
    %v2487 = vlaneseq
    %v2488 = vshrl.u32 %v2487, 7
    %v2489 = vsub.s32 %v722, %v2488
    %v2490 = vrot.slane %v2462, %v2489
    %v2491 = vlaneseq
    %v2492 = vshrl.u32 %v2491, 7
    %v2493 = vsub.s32 %v722, %v2492
    %v2494 = vrot.slane %v2463, %v2493
    %v2495 = vlaneseq
    %v2496 = vshrl.u32 %v2495, 7
    %v2497 = vsub.s32 %v722, %v2496
    %v2498 = vrot.slane %v2464, %v2497
    %v2499 = vlaneseq
    %v2500 = vshrl.u32 %v2499, 7
    %v2501 = vsub.s32 %v722, %v2500
    %v2502 = vrot.slane %v2465, %v2501
    %v2503 = vlaneseq
    %v2504 = vshrl.u32 %v2503, 7
    %v2505 = vsub.s32 %v722, %v2504
    %v2506 = vrot.slane %v2466, %v2505
    %v2507 = vsel %vm931, %v2482, %v2478
    %v2508 = vsel %vm933, %v2486, %v2507
    %v2509 = vsel %vm1460, %v2490, %v2508
    %v2510 = vsel %vm1462, %v2494, %v2509
    %v2511 = vsel %vm1464, %v2498, %v2510
    %v2512 = vsel %vm1466, %v2502, %v2511
    %v2513 = vsel %vm1468, %v2506, %v2512
    %vm2515 = vcmask 23552
    %v2516 = vsel %vm2515, %v2513, -inf
    %2517 = vmax.xlane.f32.xlu0 %v2516
    %v2518 = vpop.xlane.xlu0 %2517
    %v2520 = vlaneseq
    %v2521 = vshrl.u32 %v2520, 7
    %v2522 = vsub.s32 0, %v2521
    %v2523 = vrot.slane %v2518, %v2522
    %v2524 = vlaneseq
    %v2525 = vshrl.u32 %v2524, 7
    %v2526 = vsub.s32 1, %v2525
    %v2527 = vrot.slane %v2518, %v2526
    %v2528 = vlaneseq
    %v2529 = vshrl.u32 %v2528, 7
    %v2530 = vsub.s32 2, %v2529
    %v2531 = vrot.slane %v2518, %v2530
    %v2532 = vlaneseq
    %v2533 = vshrl.u32 %v2532, 7
    %v2534 = vsub.s32 3, %v2533
    %v2535 = vrot.slane %v2518, %v2534
    %v2536 = vlaneseq
    %v2537 = vshrl.u32 %v2536, 7
    %v2538 = vsub.s32 4, %v2537
    %v2539 = vrot.slane %v2518, %v2538
    %v2540 = vlaneseq
    %v2541 = vshrl.u32 %v2540, 7
    %v2542 = vsub.s32 5, %v2541
    %v2543 = vrot.slane %v2518, %v2542
    %v2544 = vlaneseq
    %v2545 = vshrl.u32 %v2544, 7
    %v2546 = vsub.s32 6, %v2545
    %v2547 = vrot.slane %v2518, %v2546
    %v2548 = vlaneseq
    %v2549 = vshrl.u32 %v2548, 7
    %v2550 = vsub.s32 7, %v2549
    %v2551 = vrot.slane %v2518, %v2550
    %v2560 = vsub.f32 %v2459, %v2523
    %v2561 = vsub.f32 %v2460, %v2527
    %v2562 = vsub.f32 %v2461, %v2531
    %v2563 = vsub.f32 %v2462, %v2535
    %v2564 = vsub.f32 %v2463, %v2539
    %v2565 = vsub.f32 %v2464, %v2543
    %v2566 = vsub.f32 %v2465, %v2547
    %v2567 = vsub.f32 %v2466, %v2551
    %v2568 = vmul.f32 %v2560, 1.442695
    %v2569 = vpow.pop %v2568
    %v2570 = vmul.f32 %v2561, 1.442695
    %v2571 = vpow.pop %v2570
    %v2572 = vmul.f32 %v2562, 1.442695
    %v2573 = vpow.pop %v2572
    %v2574 = vmul.f32 %v2563, 1.442695
    %v2575 = vpow.pop %v2574
    %v2576 = vmul.f32 %v2564, 1.442695
    %v2577 = vpow.pop %v2576
    %v2578 = vmul.f32 %v2565, 1.442695
    %v2579 = vpow.pop %v2578
    %v2580 = vmul.f32 %v2566, 1.442695
    %v2581 = vpow.pop %v2580
    %v2582 = vmul.f32 %v2567, 1.442695
    %v2583 = vpow.pop %v2582
    %2592 = vset.pattern.permute.xlu0 0
    %2593 = vperm.xlu0 %2592, %v2569
    %v2594 = vpop.permute.xlu0 %2593
    %2595 = vset.pattern.permute.xlu0 0
    %2596 = vperm.xlu0 %2595, %v2571
    %v2597 = vpop.permute.xlu0 %2596
    %2598 = vset.pattern.permute.xlu0 0
    %2599 = vperm.xlu0 %2598, %v2573
    %v2600 = vpop.permute.xlu0 %2599
    %2601 = vset.pattern.permute.xlu0 0
    %2602 = vperm.xlu0 %2601, %v2575
    %v2603 = vpop.permute.xlu0 %2602
    %2604 = vset.pattern.permute.xlu0 0
    %2605 = vperm.xlu0 %2604, %v2577
    %v2606 = vpop.permute.xlu0 %2605
    %2607 = vset.pattern.permute.xlu0 0
    %2608 = vperm.xlu0 %2607, %v2579
    %v2609 = vpop.permute.xlu0 %2608
    %2610 = vset.pattern.permute.xlu0 0
    %2611 = vperm.xlu0 %2610, %v2581
    %v2612 = vpop.permute.xlu0 %2611
    %2613 = vset.pattern.permute.xlu0 0
    %2614 = vperm.xlu0 %2613, %v2583
    %v2615 = vpop.permute.xlu0 %2614
    %v2616 = vlaneseq
    %v2617 = vshrl.u32 %v2616, 7
    %v2618 = vsub.s32 %v722, %v2617
    %v2619 = vrot.slane %v2594, %v2618
    %v2620 = vlaneseq
    %v2621 = vshrl.u32 %v2620, 7
    %v2622 = vsub.s32 %v722, %v2621
    %v2623 = vrot.slane %v2597, %v2622
    %v2624 = vlaneseq
    %v2625 = vshrl.u32 %v2624, 7
    %v2626 = vsub.s32 %v722, %v2625
    %v2627 = vrot.slane %v2600, %v2626
    %v2628 = vlaneseq
    %v2629 = vshrl.u32 %v2628, 7
    %v2630 = vsub.s32 %v722, %v2629
    %v2631 = vrot.slane %v2603, %v2630
    %v2632 = vlaneseq
    %v2633 = vshrl.u32 %v2632, 7
    %v2634 = vsub.s32 %v722, %v2633
    %v2635 = vrot.slane %v2606, %v2634
    %v2636 = vlaneseq
    %v2637 = vshrl.u32 %v2636, 7
    %v2638 = vsub.s32 %v722, %v2637
    %v2639 = vrot.slane %v2609, %v2638
    %v2640 = vlaneseq
    %v2641 = vshrl.u32 %v2640, 7
    %v2642 = vsub.s32 %v722, %v2641
    %v2643 = vrot.slane %v2612, %v2642
    %v2644 = vlaneseq
    %v2645 = vshrl.u32 %v2644, 7
    %v2646 = vsub.s32 %v722, %v2645
    %v2647 = vrot.slane %v2615, %v2646
    %v2648 = vsel %vm931, %v2623, %v2619
    %v2649 = vsel %vm933, %v2627, %v2648
    %v2650 = vsel %vm1460, %v2631, %v2649
    %v2651 = vsel %vm1462, %v2635, %v2650
    %v2652 = vsel %vm1464, %v2639, %v2651
    %v2653 = vsel %vm1466, %v2643, %v2652
    %v2654 = vsel %vm1468, %v2647, %v2653
    %v2656 = vsel %vm2515, %v2654, 0.0
    %2657 = vadd.xlane.f32.xlu0 %v2656
    %v2658 = vpop.xlane.xlu0 %2657
    %v2660 = vlaneseq
    %v2661 = vshrl.u32 %v2660, 7
    %v2662 = vsub.s32 0, %v2661
    %v2663 = vrot.slane %v2658, %v2662
    %v2664 = vlaneseq
    %v2665 = vshrl.u32 %v2664, 7
    %v2666 = vsub.s32 1, %v2665
    %v2667 = vrot.slane %v2658, %v2666
    %v2668 = vlaneseq
    %v2669 = vshrl.u32 %v2668, 7
    %v2670 = vsub.s32 2, %v2669
    %v2671 = vrot.slane %v2658, %v2670
    %v2672 = vlaneseq
    %v2673 = vshrl.u32 %v2672, 7
    %v2674 = vsub.s32 3, %v2673
    %v2675 = vrot.slane %v2658, %v2674
    %v2676 = vlaneseq
    %v2677 = vshrl.u32 %v2676, 7
    %v2678 = vsub.s32 4, %v2677
    %v2679 = vrot.slane %v2658, %v2678
    %v2680 = vlaneseq
    %v2681 = vshrl.u32 %v2680, 7
    %v2682 = vsub.s32 5, %v2681
    %v2683 = vrot.slane %v2658, %v2682
    %v2684 = vlaneseq
    %v2685 = vshrl.u32 %v2684, 7
    %v2686 = vsub.s32 6, %v2685
    %v2687 = vrot.slane %v2658, %v2686
    %v2688 = vlaneseq
    %v2689 = vshrl.u32 %v2688, 7
    %v2690 = vsub.s32 7, %v2689
    %v2691 = vrot.slane %v2658, %v2690
    %v2700 = vrcp.pop %v2663
    %v2701 = vmul.f32 %v2569, %v2700
    %v2702 = vrcp.pop %v2667
    %v2703 = vmul.f32 %v2571, %v2702
    %v2704 = vrcp.pop %v2671
    %v2705 = vmul.f32 %v2573, %v2704
    %v2706 = vrcp.pop %v2675
    %v2707 = vmul.f32 %v2575, %v2706
    %v2708 = vrcp.pop %v2679
    %v2709 = vmul.f32 %v2577, %v2708
    %v2710 = vrcp.pop %v2683
    %v2711 = vmul.f32 %v2579, %v2710
    %v2712 = vrcp.pop %v2687
    %v2713 = vmul.f32 %v2581, %v2712
    %v2714 = vrcp.pop %v2691
    %v2715 = vmul.f32 %v2583, %v2714
    %2717 = vset.pattern.permute.xlu0 0
    %2718 = vperm.xlu0 %2717, %v2701
    %v2719 = vpop.permute.xlu0 %2718
    %2722 = vset.pattern.permute.xlu0 0
    %2723 = vperm.xlu0 %2722, %v2703
    %v2724 = vpop.permute.xlu0 %2723
    %2727 = vset.pattern.permute.xlu0 0
    %2728 = vperm.xlu0 %2727, %v2705
    %v2729 = vpop.permute.xlu0 %2728
    %2732 = vset.pattern.permute.xlu0 0
    %2733 = vperm.xlu0 %2732, %v2707
    %v2734 = vpop.permute.xlu0 %2733
    %2737 = vset.pattern.permute.xlu0 0
    %2738 = vperm.xlu0 %2737, %v2709
    %v2739 = vpop.permute.xlu0 %2738
    %2742 = vset.pattern.permute.xlu0 0
    %2743 = vperm.xlu0 %2742, %v2711
    %v2744 = vpop.permute.xlu0 %2743
    %2747 = vset.pattern.permute.xlu0 0
    %2748 = vperm.xlu0 %2747, %v2713
    %v2749 = vpop.permute.xlu0 %2748
    %2752 = vset.pattern.permute.xlu0 0
    %2753 = vperm.xlu0 %2752, %v2715
    %v2754 = vpop.permute.xlu0 %2753
    %v2756 = vsel %vm931, %v1296, %v1289
    %v2757 = vsel %vm933, %v1303, %v2756
    %v2758 = vsel %vm931, %v1317, %v1310
    %v2759 = vsel %vm933, %v1324, %v2758
    %v2760 = vsel %vm931, %v1338, %v1331
    %v2761 = vsel %vm933, %v1345, %v2760
    %v2762 = vsel %vm931, %v1359, %v1352
    %v2763 = vsel %vm933, %v1366, %v2762
    %v2764 = vsel %vm931, %v1380, %v1373
    %v2765 = vsel %vm933, %v1387, %v2764
    %v2766 = vsel %vm931, %v1401, %v1394
    %v2767 = vsel %vm933, %v1408, %v2766
    %v2768 = vsel %vm931, %v1422, %v1415
    %v2769 = vsel %vm933, %v1429, %v2768
    %v2778 = vmul.f32 %v2719, %v1459
    %v2779 = vmul.f32 %v2724, %v2757
    %v2780 = vmul.f32 %v2729, %v2759
    %v2781 = vmul.f32 %v2734, %v2761
    %v2782 = vmul.f32 %v2739, %v2763
    %v2783 = vmul.f32 %v2744, %v2765
    %v2784 = vmul.f32 %v2749, %v2767
    %v2785 = vmul.f32 %v2754, %v2769
    %vm2786 = vcmask 256000
    %v2787 = vsel %vm2786, %v2778, 0.0
    %v2788 = vrot.slane %v2787, 4
    %v2789 = vadd.f32 %v2787, %v2788
    %v2790 = vrot.slane %v2789, 2
    %v2791 = vadd.f32 %v2789, %v2790
    %v2792 = vrot.slane %v2791, 1
    %v2793 = vadd.f32 %v2791, %v2792
    %v2794 = vsel %vm2786, %v2779, 0.0
    %v2795 = vrot.slane %v2794, 4
    %v2796 = vadd.f32 %v2794, %v2795
    %v2797 = vrot.slane %v2796, 2
    %v2798 = vadd.f32 %v2796, %v2797
    %v2799 = vrot.slane %v2798, 1
    %v2800 = vadd.f32 %v2798, %v2799
    %v2801 = vsel %vm2786, %v2780, 0.0
    %v2802 = vrot.slane %v2801, 4
    %v2803 = vadd.f32 %v2801, %v2802
    %v2804 = vrot.slane %v2803, 2
    %v2805 = vadd.f32 %v2803, %v2804
    %v2806 = vrot.slane %v2805, 1
    %v2807 = vadd.f32 %v2805, %v2806
    %v2808 = vsel %vm2786, %v2781, 0.0
    %v2809 = vrot.slane %v2808, 4
    %v2810 = vadd.f32 %v2808, %v2809
    %v2811 = vrot.slane %v2810, 2
    %v2812 = vadd.f32 %v2810, %v2811
    %v2813 = vrot.slane %v2812, 1
    %v2814 = vadd.f32 %v2812, %v2813
    %v2815 = vsel %vm2786, %v2782, 0.0
    %v2816 = vrot.slane %v2815, 4
    %v2817 = vadd.f32 %v2815, %v2816
    %v2818 = vrot.slane %v2817, 2
    %v2819 = vadd.f32 %v2817, %v2818
    %v2820 = vrot.slane %v2819, 1
    %v2821 = vadd.f32 %v2819, %v2820
    %v2822 = vsel %vm2786, %v2783, 0.0
    %v2823 = vrot.slane %v2822, 4
    %v2824 = vadd.f32 %v2822, %v2823
    %v2825 = vrot.slane %v2824, 2
    %v2826 = vadd.f32 %v2824, %v2825
    %v2827 = vrot.slane %v2826, 1
    %v2828 = vadd.f32 %v2826, %v2827
    %v2829 = vsel %vm2786, %v2784, 0.0
    %v2830 = vrot.slane %v2829, 4
    %v2831 = vadd.f32 %v2829, %v2830
    %v2832 = vrot.slane %v2831, 2
    %v2833 = vadd.f32 %v2831, %v2832
    %v2834 = vrot.slane %v2833, 1
    %v2835 = vadd.f32 %v2833, %v2834
    %v2836 = vsel %vm2786, %v2785, 0.0
    %v2837 = vrot.slane %v2836, 4
    %v2838 = vadd.f32 %v2836, %v2837
    %v2839 = vrot.slane %v2838, 2
    %v2840 = vadd.f32 %v2838, %v2839
    %v2841 = vrot.slane %v2840, 1
    %v2842 = vadd.f32 %v2840, %v2841
    %v2843 = vld [vmem:[%s11] sm:$0xff]
    %v2844 = vld [vmem:[%s11 + $0x8] sm:$0xff]
    %v2845 = vld [vmem:[%s11 + $0x10] sm:$0xff]
    %v2846 = vld [vmem:[%s11 + $0x18] sm:$0xff]
    %v2847 = vld [vmem:[%s12] sm:$0xff]
    %v2848 = vld [vmem:[%s12 + $0x8] sm:$0xff]
    %2849 = vmatprep.subr.mxu0 0.0
    %2850 = vmatpush1.msra.mxu0 %v2847
    %2851 = vmatprep.subr.mxu0 0.0
    %2852 = vmatpush1.msra.mxu0 %v2848
    %2853 = vmatprep.subr.mxu0 0.0
    %2854 = vmatpush1.msra.mxu0 0.0
    %2855 = vmatprep.subr.mxu0 0.0
    %2856 = vmatpush1.msra.mxu0 0.0
    %2857 = vmatprep.subr.mxu0 0.0
    %2858 = vmatpush1.msra.mxu0 0.0
    %2859 = vmatprep.subr.mxu0 0.0
    %2860 = vmatpush1.msra.mxu0 0.0
    %2861 = vmatprep.subr.mxu0 0.0
    %2862 = vmatpush1.msra.mxu0 0.0
    %2863 = vmatprep.subr.mxu0 0.0
    %2864 = vmatpush1.msra.mxu0 0.0
    %2865 = vmatprep.subr.mxu0 0.0
    %2866 = vmatpush1.msra.mxu0 0.0
    %2867 = vmatprep.subr.mxu0 0.0
    %2868 = vmatpush1.msra.mxu0 0.0
    %2869 = vmatprep.subr.mxu0 0.0
    %2870 = vmatpush1.msra.mxu0 0.0
    %2871 = vmatprep.subr.mxu0 0.0
    %2872 = vmatpush1.msra.mxu0 0.0
    %2873 = vmatprep.subr.mxu0 0.0
    %2874 = vmatpush1.msra.mxu0 0.0
    %2875 = vmatprep.subr.mxu0 0.0
    %2876 = vmatpush1.msra.mxu0 0.0
    %2877 = vmatprep.subr.mxu0 0.0
    %2878 = vmatpush1.msra.mxu0 0.0
    %2879 = vmatprep.subr.mxu0 0.0
    %2880 = vmatpush1.msra.mxu0 0.0
    %2881 = vmatprep.subr.mxu0 0.0
    %2882 = vmatpush1.msra.mxu0 0.0
    %2883 = vmatprep.subr.mxu0 0.0
    %2884 = vmatpush1.msra.mxu0 0.0
    %2885 = vmatprep.subr.mxu0 0.0
    %2886 = vmatpush1.msra.mxu0 0.0
    %2887 = vmatprep.subr.mxu0 0.0
    %2888 = vmatpush1.msra.mxu0 0.0
    %2889 = vmatprep.subr.mxu0 0.0
    %2890 = vmatpush1.msra.mxu0 0.0
    %2891 = vmatprep.subr.mxu0 0.0
    %2892 = vmatpush1.msra.mxu0 0.0
    %2893 = vmatprep.subr.mxu0 0.0
    %2894 = vmatpush1.msra.mxu0 0.0
    %2895 = vmatprep.subr.mxu0 0.0
    %2896 = vmatpush1.msra.mxu0 0.0
    %2897 = vmatprep.subr.mxu0 0.0
    %2898 = vmatpush1.msra.mxu0 0.0
    %2899 = vmatprep.subr.mxu0 0.0
    %2900 = vmatpush1.msra.mxu0 0.0
    %2901 = vmatprep.subr.mxu0 0.0
    %2902 = vmatpush1.msra.mxu0 0.0
    %2903 = vmatprep.subr.mxu0 0.0
    %2904 = vmatpush1.msra.mxu0 0.0
    %2905 = vmatprep.subr.mxu0 0.0
    %2906 = vmatpush1.msra.mxu0 0.0
    %2907 = vmatprep.subr.mxu0 0.0
    %2908 = vmatpush1.msra.mxu0 0.0
    %2909 = vmatprep.subr.mxu0 0.0
    %2910 = vmatpush1.msra.mxu0 0.0
    %2911 = vmatprep.subr.mxu0 0.0
    %2912 = vmatpush1.msra.mxu0 0.0
    %2913 = vmatprep.mubr.f32.mxu0 0.0
    %2914 = vmatmul.mubr.f32.gmra.mrb[0].mxu0 %v383
    %v2915 = vpop.f32.mrb[0].mxu0
    %v2916 = vadd.f32 0.0, %v2915
    %v2917 = vpop.f32.mrb[0].mxu0
    %2918 = vdwg.mxu0
    %v2927 = vsel %vm931, %v2800, %v2793
    %v2928 = vsel %vm933, %v2807, %v2927
    %v2929 = vsel %vm1460, %v2814, %v2928
    %v2930 = vsel %vm1462, %v2821, %v2929
    %v2931 = vsel %vm1464, %v2828, %v2930
    %v2932 = vsel %vm1466, %v2835, %v2931
    %v2933 = vsel %vm1468, %v2842, %v2932
    %v2934 = vsel %vm114, %v2933, 0
    %2936 = vmatprep.subr.mxu0 0.0
    %2937 = vmatpush1.msra.mxu0 %v2843
    %2938 = vmatprep.subr.mxu0 0.0
    %2939 = vmatpush1.msra.mxu0 %v2844
    %2940 = vmatprep.subr.mxu0 0.0
    %2941 = vmatpush1.msra.mxu0 %v2845
    %2942 = vmatprep.subr.mxu0 0.0
    %2943 = vmatpush1.msra.mxu0 %v2846
    %2944 = vmatprep.subr.mxu0 0.0
    %2945 = vmatpush1.msra.mxu0 0.0
    %2946 = vmatprep.subr.mxu0 0.0
    %2947 = vmatpush1.msra.mxu0 0.0
    %2948 = vmatprep.subr.mxu0 0.0
    %2949 = vmatpush1.msra.mxu0 0.0
    %2950 = vmatprep.subr.mxu0 0.0
    %2951 = vmatpush1.msra.mxu0 0.0
    %2952 = vmatprep.subr.mxu0 0.0
    %2953 = vmatpush1.msra.mxu0 0.0
    %2954 = vmatprep.subr.mxu0 0.0
    %2955 = vmatpush1.msra.mxu0 0.0
    %2956 = vmatprep.subr.mxu0 0.0
    %2957 = vmatpush1.msra.mxu0 0.0
    %2958 = vmatprep.subr.mxu0 0.0
    %2959 = vmatpush1.msra.mxu0 0.0
    %2960 = vmatprep.subr.mxu0 0.0
    %2961 = vmatpush1.msra.mxu0 0.0
    %2962 = vmatprep.subr.mxu0 0.0
    %2963 = vmatpush1.msra.mxu0 0.0
    %2964 = vmatprep.subr.mxu0 0.0
    %2965 = vmatpush1.msra.mxu0 0.0
    %2966 = vmatprep.subr.mxu0 0.0
    %2967 = vmatpush1.msra.mxu0 0.0
    %2968 = vmatprep.subr.mxu0 0.0
    %2969 = vmatpush1.msra.mxu0 0.0
    %2970 = vmatprep.subr.mxu0 0.0
    %2971 = vmatpush1.msra.mxu0 0.0
    %2972 = vmatprep.subr.mxu0 0.0
    %2973 = vmatpush1.msra.mxu0 0.0
    %2974 = vmatprep.subr.mxu0 0.0
    %2975 = vmatpush1.msra.mxu0 0.0
    %2976 = vmatprep.subr.mxu0 0.0
    %2977 = vmatpush1.msra.mxu0 0.0
    %2978 = vmatprep.subr.mxu0 0.0
    %2979 = vmatpush1.msra.mxu0 0.0
    %2980 = vmatprep.subr.mxu0 0.0
    %2981 = vmatpush1.msra.mxu0 0.0
    %2982 = vmatprep.subr.mxu0 0.0
    %2983 = vmatpush1.msra.mxu0 0.0
    %2984 = vmatprep.subr.mxu0 0.0
    %2985 = vmatpush1.msra.mxu0 0.0
    %2986 = vmatprep.subr.mxu0 0.0
    %2987 = vmatpush1.msra.mxu0 0.0
    %2988 = vmatprep.subr.mxu0 0.0
    %2989 = vmatpush1.msra.mxu0 0.0
    %2990 = vmatprep.subr.mxu0 0.0
    %2991 = vmatpush1.msra.mxu0 0.0
    %2992 = vmatprep.subr.mxu0 0.0
    %2993 = vmatpush1.msra.mxu0 0.0
    %2994 = vmatprep.subr.mxu0 0.0
    %2995 = vmatpush1.msra.mxu0 0.0
    %2996 = vmatprep.subr.mxu0 0.0
    %2997 = vmatpush1.msra.mxu0 0.0
    %2998 = vmatprep.subr.mxu0 0.0
    %2999 = vmatpush1.msra.mxu0 0.0
    %3000 = vmatprep.mubr.f32.mxu0 0.0
    %3001 = vmatmul.mubr.f32.gmra.mrb[0].mxu0 %v2934
    %v3002 = vpop.f32.mrb[0].mxu0
    %v3003 = vadd.f32 %v2916, %v3002
    %v3004 = vpop.f32.mrb[0].mxu0
    %3005 = vdwg.mxu0
    %v3006 = vld [vmem:[%s13] sm:$0x1]
    %v3008 = vlaneseq
    %v3009 = vshrl.u32 %v3008, 7
    %v3010 = vsub.s32 0, %v3009
    %v3011 = vrot.slane %v3006, %v3010
    %v3013 = vadd.f32 %v3003, %v3011
    %v3014 = vtanh.pop %v3013
    %v3015 = vld [vmem:[%s14] sm:$0xff]
    %v3016 = vld [vmem:[%s14 + $0x8] sm:$0xff]
    %v3017 = vld [vmem:[%s14 + $0x10] sm:$0xff]
    %v3018 = vld [vmem:[%s14 + $0x18] sm:$0xff]
    %v3019 = vstv %s109
    %v3021 = vsel %vm114, %v3014, 0
    %3023 = vmatprep.subr.mxu0 0.0
    %3024 = vmatpush1.msra.mxu0 %v3015
    %3025 = vmatprep.subr.mxu0 0.0
    %3026 = vmatpush1.msra.mxu0 %v3016
    %3027 = vmatprep.subr.mxu0 0.0
    %3028 = vmatpush1.msra.mxu0 %v3017
    %3029 = vmatprep.subr.mxu0 0.0
    %3030 = vmatpush1.msra.mxu0 %v3018
    %3031 = vmatprep.subr.mxu0 0.0
    %3032 = vmatpush1.msra.mxu0 0.0
    %3033 = vmatprep.subr.mxu0 0.0
    %3034 = vmatpush1.msra.mxu0 0.0
    %3035 = vmatprep.subr.mxu0 0.0
    %3036 = vmatpush1.msra.mxu0 0.0
    %3037 = vmatprep.subr.mxu0 0.0
    %3038 = vmatpush1.msra.mxu0 0.0
    %3039 = vmatprep.subr.mxu0 0.0
    %3040 = vmatpush1.msra.mxu0 0.0
    %3041 = vmatprep.subr.mxu0 0.0
    %3042 = vmatpush1.msra.mxu0 0.0
    %3043 = vmatprep.subr.mxu0 0.0
    %3044 = vmatpush1.msra.mxu0 0.0
    %3045 = vmatprep.subr.mxu0 0.0
    %3046 = vmatpush1.msra.mxu0 0.0
    %3047 = vmatprep.subr.mxu0 0.0
    %3048 = vmatpush1.msra.mxu0 0.0
    %3049 = vmatprep.subr.mxu0 0.0
    %3050 = vmatpush1.msra.mxu0 0.0
    %3051 = vmatprep.subr.mxu0 0.0
    %3052 = vmatpush1.msra.mxu0 0.0
    %3053 = vmatprep.subr.mxu0 0.0
    %3054 = vmatpush1.msra.mxu0 0.0
    %3055 = vmatprep.subr.mxu0 0.0
    %3056 = vmatpush1.msra.mxu0 0.0
    %3057 = vmatprep.subr.mxu0 0.0
    %3058 = vmatpush1.msra.mxu0 0.0
    %3059 = vmatprep.subr.mxu0 0.0
    %3060 = vmatpush1.msra.mxu0 0.0
    %3061 = vmatprep.subr.mxu0 0.0
    %3062 = vmatpush1.msra.mxu0 0.0
    %3063 = vmatprep.subr.mxu0 0.0
    %3064 = vmatpush1.msra.mxu0 0.0
    %3065 = vmatprep.subr.mxu0 0.0
    %3066 = vmatpush1.msra.mxu0 0.0
    %3067 = vmatprep.subr.mxu0 0.0
    %3068 = vmatpush1.msra.mxu0 0.0
    %3069 = vmatprep.subr.mxu0 0.0
    %3070 = vmatpush1.msra.mxu0 0.0
    %3071 = vmatprep.subr.mxu0 0.0
    %3072 = vmatpush1.msra.mxu0 0.0
    %3073 = vmatprep.subr.mxu0 0.0
    %3074 = vmatpush1.msra.mxu0 0.0
    %3075 = vmatprep.subr.mxu0 0.0
    %3076 = vmatpush1.msra.mxu0 0.0
    %3077 = vmatprep.subr.mxu0 0.0
    %3078 = vmatpush1.msra.mxu0 0.0
    %3079 = vmatprep.subr.mxu0 0.0
    %3080 = vmatpush1.msra.mxu0 0.0
    %3081 = vmatprep.subr.mxu0 0.0
    %3082 = vmatpush1.msra.mxu0 0.0
    %3083 = vmatprep.subr.mxu0 0.0
    %3084 = vmatpush1.msra.mxu0 0.0
    %3085 = vmatprep.subr.mxu0 0.0
    %3086 = vmatpush1.msra.mxu0 0.0
    %3087 = vmatprep.mubr.f32.mxu0 0.0
    %3088 = vmatmul.mubr.f32.gmra.mrb[0].mxu0 %v3021
    %v3089 = vpop.f32.mrb[0].mxu0
    %v3090 = vadd.f32 %v3019, %v3089
    %v3091 = vpop.f32.mrb[0].mxu0
    %3092 = vdwg.mxu0
    %v3093 = vadd.s32 %v722, 4294967295
    %v3094 = vlaneseq
    %v3095 = vshrl.u32 %v3094, 7
    %v3096 = vsub.s32 %v3093, %v3095
    %v3097 = vrot.slane %v2719, %v3096
    %v3098 = vlaneseq
    %v3099 = vshrl.u32 %v3098, 7
    %v3100 = vsub.s32 %v3093, %v3099
    %v3101 = vrot.slane %v2724, %v3100
    %v3102 = vlaneseq
    %v3103 = vshrl.u32 %v3102, 7
    %v3104 = vsub.s32 %v3093, %v3103
    %v3105 = vrot.slane %v2729, %v3104
    %v3106 = vlaneseq
    %v3107 = vshrl.u32 %v3106, 7
    %v3108 = vsub.s32 %v3093, %v3107
    %v3109 = vrot.slane %v2734, %v3108
    %v3110 = vlaneseq
    %v3111 = vshrl.u32 %v3110, 7
    %v3112 = vsub.s32 %v3093, %v3111
    %v3113 = vrot.slane %v2739, %v3112
    %v3114 = vlaneseq
    %v3115 = vshrl.u32 %v3114, 7
    %v3116 = vsub.s32 %v3093, %v3115
    %v3117 = vrot.slane %v2744, %v3116
    %v3118 = vlaneseq
    %v3119 = vshrl.u32 %v3118, 7
    %v3120 = vsub.s32 %v3093, %v3119
    %v3121 = vrot.slane %v2749, %v3120
    %v3122 = vlaneseq
    %v3123 = vshrl.u32 %v3122, 7
    %v3124 = vsub.s32 %v3093, %v3123
    %v3125 = vrot.slane %v2754, %v3124
    %v3126 = vsel %vm931, %v3101, %v3097
    %v3127 = vsel %vm933, %v3105, %v3126
    %v3128 = vsel %vm1460, %v3109, %v3127
    %v3129 = vsel %vm1462, %v3113, %v3128
    %v3130 = vsel %vm1464, %v3117, %v3129
    %v3131 = vsel %vm1466, %v3121, %v3130
    %v3132 = vsel %vm1468, %v3125, %v3131
    %v3142 = vrot.slane %v1057, 7
    %v3143 = vsel %vm931, %v3142, %v1055
    %v3144 = vrot.slane %v1059, 6
    %v3145 = vsel %vm933, %v3144, %v3143
    %v3146 = vrot.slane %v1061, 5
    %v3147 = vsel %vm1460, %v3146, %v3145
    %v3148 = vrot.slane %v1063, 4
    %v3149 = vsel %vm1462, %v3148, %v3147
    %v3150 = vrot.slane %v1065, 3
    %v3151 = vsel %vm1464, %v3150, %v3149
    %v3152 = vrot.slane %v1067, 2
    %v3153 = vsel %vm1466, %v3152, %v3151
    %v3154 = vrot.slane %v1069, 1
    %v3155 = vsel %vm1468, %v3154, %v3153
    %3156 = vrot.lane.b32.xlu0 %v3155, 4
    %v3157 = vpop.permute.xlu0 %3156
    %v3159 = vrot.slane %v1055, 1
    %v3160 = vsel %vm931, %v1057, %v3159
    %v3161 = vrot.slane %v1059, 7
    %v3162 = vsel %vm933, %v3161, %v3160
    %v3163 = vrot.slane %v1061, 6
    %v3164 = vsel %vm1460, %v3163, %v3162
    %v3165 = vrot.slane %v1063, 5
    %v3166 = vsel %vm1462, %v3165, %v3164
    %v3167 = vrot.slane %v1065, 4
    %v3168 = vsel %vm1464, %v3167, %v3166
    %v3169 = vrot.slane %v1067, 3
    %v3170 = vsel %vm1466, %v3169, %v3168
    %v3171 = vrot.slane %v1069, 2
    %v3172 = vsel %vm1468, %v3171, %v3170
    %3173 = vrot.lane.b32.xlu0 %v3172, 12
    %v3174 = vpop.permute.xlu0 %3173
    %v3176 = vrot.slane %v1055, 2
    %v3177 = vrot.slane %v1057, 1
    %v3178 = vsel %vm931, %v3177, %v3176
    %v3179 = vsel %vm933, %v1059, %v3178
    %v3180 = vrot.slane %v1061, 7
    %v3181 = vsel %vm1460, %v3180, %v3179
    %v3182 = vrot.slane %v1063, 6
    %v3183 = vsel %vm1462, %v3182, %v3181
    %v3184 = vrot.slane %v1065, 5
    %v3185 = vsel %vm1464, %v3184, %v3183
    %v3186 = vrot.slane %v1067, 4
    %v3187 = vsel %vm1466, %v3186, %v3185
    %v3188 = vrot.slane %v1069, 3
    %v3189 = vsel %vm1468, %v3188, %v3187
    %3190 = vrot.lane.b32.xlu0 %v3189, 20
    %v3191 = vpop.permute.xlu0 %3190
    %vm3193 = vcmask 7168
    %v3194 = vsel %vm3193, %v3090, %v3132
    %vm3195 = vcmask 31744
    %v3196 = vsel %vm3195, %v3194, %v3157
    %vm3197 = vcmask 97280
    %v3198 = vsel %vm3197, %v3196, %v3174
    %vm3199 = vcmask 162816
    %v3200 = vsel %vm3199, %v3198, %v3191
    %vm3201 = vcmask 228352
    %v3202 = vsel %vm3201, %v3200, 0.0
    %3203 = vst [vmem:[#allocation7] sm:$0xff] %v3202
    // Predicated region
    $region74: #{tpu_custom_call.1} parent=1 // pred_check
      _
    $region75: #{tpu_custom_call.1} parent=1 // pred_check_branch
      %3205 = sbr.rel (0) target = $region77
    $region76: #{tpu_custom_call.1} parent=1 // pred_region
      %s3207 = ssub.s32 128, 128
      %3208 = vsyncadd [#allocation4], %s3207
      %s3210 = sshll.u32 [#allocation7], 4
      %s3211 = int_to_ptr.vmem [resolvable:$true] %s3210
      %3213 = dma.vmem_to_hbm [thread:$0]  %s3211, 128, %s16, [#allocation4]
    $region77: #{tpu_custom_call.1} parent=1 // pred_fallthru
      _
    // Predicated region
    $region78: #{tpu_custom_call.1} parent=1 // pred_check
      _
    $region79: #{tpu_custom_call.1} parent=1 // pred_check_branch
      %3215 = sbr.rel (0) target = $region81
    $region80: #{tpu_custom_call.1} parent=1 // pred_region
      %3216 = dma.done [#allocation4], 128
    $region81: #{tpu_custom_call.1} parent=1 // pred_fallthru
      _
    %3217 = vsyncpa [#allocation3], 1
    %3218 = vsyncpa [#allocation4], 1
    %3219 = vsyncpa [#allocation5], 1

</llo_original>
